<compile_context>
chip_gen: v5e
topology: v5e:2x2
jax: 0.10.0
libtpu: 0.0.40
codegen_flags: <defaults>
</compile_context>

<pallas_src>
import functools

import jax
import jax.numpy as jnp
from jax.experimental import pallas as pl
from jax.experimental.pallas import tpu as pltpu


def _round_up(x, m):
    return (x + m - 1) // m * m


# ----------------------------------------------------------------------------
# Fused Pallas kernel: one MXU dot + one-pass BatchNorm (scale/shift fused
# with the store).
# ----------------------------------------------------------------------------
def _deconv_bn_kernel(x_ref, w_ref, g_ref, bt_ref, o_ref, *, m_true, eps):
    # Single full-depth MXU contraction: (M_pad, K_pad) x (K_pad, TCO) -> f32.
    acc = jnp.dot(x_ref[...], w_ref[...], preferred_element_type=jnp.float32)

    # One-pass per-channel statistics.  Zero-padded M rows contribute exactly
    # zero to both sums (their im2col rows are zero), so dividing by the true
    # M gives the correct batch statistics.
    inv_m = jnp.float32(1.0 / m_true)
    s1 = jnp.sum(acc, axis=0, keepdims=True)                 # (1, TCO)
    s2 = jnp.sum(acc * acc, axis=0, keepdims=True)           # (1, TCO)
    mean = s1 * inv_m
    var = s2 * inv_m - mean * mean                           # biased variance
    inv = jax.lax.rsqrt(var + eps)                           # EUP slot

    # Fold mean/var/gamma/beta into one per-channel scale+shift, applied in a
    # single pass fused with the store.
    scale = inv * g_ref[...]
    shift = bt_ref[...] - mean * scale
    o_ref[...] = (acc * scale + shift).astype(o_ref.dtype)


# ----------------------------------------------------------------------------
# Wrapper-side layout plumbing (pure XLA): dilation, padding, im2col, packing.
# ----------------------------------------------------------------------------
def _dilate_pad(x, k, s, p):
    """Zero-dilate by stride s and edge-pad by (k-1-p).  x: (N, H, W, C)."""
    n, h, w, c = x.shape
    if s > 1:
        xz = x[:, :, None, :, None, :]                                    # (n,h,1,w,1,c)
        xz = jnp.pad(xz, ((0, 0), (0, 0), (0, s - 1), (0, 0), (0, s - 1), (0, 0)))
        x = xz.reshape(n, h * s, w * s, c)[:, :(h - 1) * s + 1, :(w - 1) * s + 1, :]
    pad = k - 1 - p
    if pad > 0:
        x = jnp.pad(x, ((0, 0), (pad, pad), (pad, pad), (0, 0)))
    elif pad < 0:
        x = x[:, -pad:pad, -pad:pad, :]
    return x


def _im2col(xd, k, ho, wo):
    """(N, Hd, Wd, Cin) -> (N*Ho*Wo, k*k*Cin), columns ordered (kh, kw, cin)."""
    n, _, _, cin = xd.shape
    cols = []
    for kh in range(k):
        for kw in range(k):
            cols.append(xd[:, kh:kh + ho, kw:kw + wo, :])
    xc = jnp.concatenate(cols, axis=-1)                       # (N, Ho, Wo, k*k*Cin)
    return xc.reshape(n * ho * wo, k * k * cin)


def _decbr2d_fused(x_nhwc, wd, gamma, beta, *, k, s, p, eps=1e-5):
    """x_nhwc: (N, H, W, Cin); wd: (Cin, Cout, k, k) -> (N, Ho, Wo, Cout) f32."""
    n, h, w, cin = x_nhwc.shape
    cout = wd.shape[1]
    ho = (h - 1) * s - 2 * p + k
    wo = (w - 1) * s - 2 * p + k
    m = n * ho * wo
    kk = k * k * cin

    # Lane/sublane-dense padding targets.
    k_pad = _round_up(kk, 128)
    m_pad = _round_up(m, 8)
    cout_pad = _round_up(cout, 128)

    # Activations: dilate + pad + im2col, zero-pad to (M_pad, K_pad), bf16.
    xd = _dilate_pad(x_nhwc, k, s, p)
    xcol = _im2col(xd, k, ho, wo)
    xcol = jnp.pad(xcol, ((0, m_pad - m), (0, k_pad - kk))).astype(jnp.bfloat16)

    # ConvTranspose == stride-1 conv with the flipped kernel, in/out swapped.
    # Row layout (kh, kw, cin) matches the im2col column layout.
    w_eq = jnp.flip(wd, axis=(2, 3)).transpose(2, 3, 0, 1).reshape(kk, cout)
    w_eq = jnp.pad(w_eq, ((0, k_pad - kk), (0, cout_pad - cout))).astype(jnp.bfloat16)

    g = jnp.pad(gamma.astype(jnp.float32), (0, cout_pad - cout)).reshape(1, cout_pad)
    bt = jnp.pad(beta.astype(jnp.float32), (0, cout_pad - cout)).reshape(1, cout_pad)

    # Cout tile: 256 on a 256-wide MXU-friendly padded extent, else 128.
    tco = 256 if cout_pad % 256 == 0 else 128
    grid = (cout_pad // tco,)

    # Explicit scoped-VMEM budget (double-buffered inputs/outputs + f32 temps),
    # capped at 64 MiB so the same value is legal on v7x.
    xb = m_pad * k_pad * 2
    wb = k_pad * tco * 2
    ob = m_pad * tco * 4
    vmem = 2 * (xb + wb + ob) + 6 * m_pad * tco * 4 + (1 << 20)
    vmem = int(min(max(vmem, 16 << 20), 64 << 20))

    kernel = functools.partial(_deconv_bn_kernel, m_true=float(m), eps=eps)
    out2d = pl.pallas_call(
        kernel,
        out_shape=jax.ShapeDtypeStruct((m_pad, cout_pad), jnp.float32),
        grid_spec=pltpu.PrefetchScalarGridSpec(
            num_scalar_prefetch=0,
            grid=grid,
            in_specs=[
                # Constant block index -> activation slab stays VMEM-resident
                # across Cout tiles (single DMA).
                pl.BlockSpec((m_pad, k_pad), lambda j: (0, 0)),
                pl.BlockSpec((k_pad, tco), lambda j: (0, j)),
                pl.BlockSpec((1, tco), lambda j: (0, j)),
                pl.BlockSpec((1, tco), lambda j: (0, j)),
            ],
            out_specs=pl.BlockSpec((m_pad, tco), lambda j: (0, j)),
        ),
        compiler_params=pltpu.CompilerParams(
            dimension_semantics=("parallel",),
            vmem_limit_bytes=vmem),
    )(xcol, w_eq, g, bt)

    # Un-pad + reshape back to NHWC (pure layout plumbing in XLA).
    return out2d[:m, :cout].reshape(n, ho, wo, cout)


def decbr2d_forward(x_nchw, wd, bias, gamma, beta, *, k, s, p, eps=1e-5):
    """DeCBR2d.forward: ConvTranspose2d(cin,cout,k,s,p) -> BatchNorm2d (train).

    The deconv bias is intentionally not fed to the kernel: a per-channel
    constant added before training-mode BatchNorm cancels exactly in the
    normalization, so it cannot change the returned tensor.
    """
    del bias
    x = jnp.transpose(x_nchw, (0, 2, 3, 1)).astype(jnp.float32)   # NCHW -> NHWC
    y = _decbr2d_fused(x, wd, gamma, beta, k=k, s=s, p=p, eps=eps)
    return jnp.transpose(y, (0, 3, 1, 2))                          # back to NCHW


# ----------------------------------------------------------------------------
# Pure-JAX reference (PyTorch semantics) for correctness checking
# ----------------------------------------------------------------------------
def ref_decbr2d(x_nchw, wd, bias, gamma, beta, *, k, s, p, eps=1e-5):
    x = jnp.transpose(x_nchw, (0, 2, 3, 1)).astype(jnp.float32)
    w_hwio = jnp.flip(wd, axis=(2, 3)).transpose(2, 3, 0, 1)       # (k,k,cin,cout)
    pad = k - 1 - p
    y = jax.lax.conv_general_dilated(
        x, w_hwio, window_strides=(1, 1),
        padding=[(pad, pad), (pad, pad)],
        lhs_dilation=(s, s), rhs_dilation=(1, 1),
        dimension_numbers=("NHWC", "HWIO", "NHWC"))
    y = y + bias
    mean = jnp.mean(y, axis=(0, 1, 2), keepdims=True)
    var = jnp.mean(jnp.square(y - mean), axis=(0, 1, 2), keepdims=True)
    y = (y - mean) * jax.lax.rsqrt(var + eps) * gamma + beta
    return jnp.transpose(y, (0, 3, 1, 2))


# ----------------------------------------------------------------------------
# Main
# ----------------------------------------------------------------------------
if __name__ == "__main__":
    key = jax.random.PRNGKey(0)
    kx, kp = jax.random.split(key)

    n, h, w = 2, 16, 16
    cin = 4
    x = jax.random.normal(kx, (n, cin, h, w), jnp.float32)          # NCHW

    # (cout, k, s, p): 2x upsample, 2x non-overlapping upsample, spatial-preserving
    configs = [
        (8, 3, 2, 1),
        (16, 2, 2, 0),
        (8, 3, 1, 1),
    ]

    for cout, k, s, p in configs:
        kp, kw_, kb_ = jax.random.split(kp, 3)
        bound = 1.0 / jnp.sqrt(float(cout * k * k))
        wd = jax.random.uniform(kw_, (cin, cout, k, k), jnp.float32, -bound, bound)
        b = jax.random.uniform(kb_, (cout,), jnp.float32, -bound, bound)
        gamma = jnp.ones((cout,), jnp.float32)      # fresh nn.BatchNorm2d defaults
        beta = jnp.zeros((cout,), jnp.float32)

        fwd = jax.jit(functools.partial(decbr2d_forward, k=k, s=s, p=p))
        out = fwd(x, wd, b, gamma, beta)
        jax.block_until_ready(out)

        ho = (h - 1) * s - 2 * p + k
        wo = (w - 1) * s - 2 * p + k
        assert out.shape == (n, cout, ho, wo), out.shape
        assert bool(jnp.all(jnp.isfinite(out)))

        ref = ref_decbr2d(x, wd, b, gamma, beta, k=k, s=s, p=p)
        err = float(jnp.max(jnp.abs(out - ref)))
        assert bool(jnp.allclose(out, ref, atol=5e-2, rtol=5e-2)), (cout, k, s, p, err)

    print("KERNEL_OK")
</pallas_src>

<mosaic_0001>
module attributes {stable_mosaic.version = 11 : i64} {
  func.func @_deconv_bn_kernel(%arg0: i32, %arg1: memref<1928x128xbf16, #tpu.memory_space<vmem>>, %arg2: memref<128x128xbf16, #tpu.memory_space<vmem>>, %arg3: memref<1x128xf32, #tpu.memory_space<vmem>>, %arg4: memref<1x128xf32, #tpu.memory_space<vmem>>, %arg5: memref<1928x128xf32, #tpu.memory_space<vmem>>) attributes {dimension_semantics = [#tpu.dimension_semantics<parallel>], iteration_bounds = array<i64: 1>, scalar_prefetch = 0 : i64, scratch_operands = 0 : i64, tpu.core_type = #tpu.core_type<tc>, window_params = [{pipeline_mode = #tpu.pipeline_mode<synchronous>, transform_indices = @transform_0, window_bounds = array<i64: 1928, 128>}, {transform_indices = @transform_1, window_bounds = array<i64: 128, 128>}, {transform_indices = @transform_2, window_bounds = array<i64: 1, 128>}, {transform_indices = @transform_3, window_bounds = array<i64: 1, 128>}, {transform_indices = @transform_4, window_bounds = array<i64: 1928, 128>}]} {
    %c0 = arith.constant 0 : index
    %c0_0 = arith.constant 0 : index
    %0 = vector.load %arg1[%c0, %c0_0] : memref<1928x128xbf16, #tpu.memory_space<vmem>>, vector<1928x128xbf16>
    %c0_1 = arith.constant 0 : index
    %c0_2 = arith.constant 0 : index
    %1 = vector.load %arg2[%c0_1, %c0_2] : memref<128x128xbf16, #tpu.memory_space<vmem>>, vector<128x128xbf16>
    %cst = arith.constant dense<0.000000e+00> : vector<1928x128xf32>
    %2 = tpu.matmul %0, %1, %cst {dimension_numbers = #tpu.dot_dimension_numbers<[1], [0], [0], [1], [0, 0, 1, 1], [], []>} : vector<1928x128xbf16>, vector<128x128xbf16>, vector<1928x128xf32> -> vector<1928x128xf32>
    %cst_3 = arith.constant dense<0.000000e+00> : vector<128xf32>
    %3 = vector.multi_reduction <add>, %2, %cst_3 [0] : vector<1928x128xf32> to vector<128xf32>
    %4 = vector.shape_cast %3 : vector<128xf32> to vector<1x128xf32>
    %5 = arith.mulf %2, %2 : vector<1928x128xf32>
    %cst_4 = arith.constant dense<0.000000e+00> : vector<128xf32>
    %6 = vector.multi_reduction <add>, %5, %cst_4 [0] : vector<1928x128xf32> to vector<128xf32>
    %7 = vector.shape_cast %6 : vector<128xf32> to vector<1x128xf32>
    %cst_5 = arith.constant 5.20291389E-4 : f32
    %8 = vector.broadcast %cst_5 : f32 to vector<1x128xf32>
    %9 = arith.mulf %4, %8 : vector<1x128xf32>
    %cst_6 = arith.constant 5.20291389E-4 : f32
    %10 = vector.broadcast %cst_6 : f32 to vector<1x128xf32>
    %11 = arith.mulf %7, %10 : vector<1x128xf32>
    %12 = arith.mulf %9, %9 : vector<1x128xf32>
    %13 = arith.subf %11, %12 : vector<1x128xf32>
    %cst_7 = arith.constant 9.99999974E-6 : f32
    %14 = vector.broadcast %cst_7 : f32 to vector<1x128xf32>
    %15 = arith.addf %13, %14 : vector<1x128xf32>
    %16 = math.rsqrt %15 : vector<1x128xf32>
    %c0_8 = arith.constant 0 : index
    %c0_9 = arith.constant 0 : index
    %17 = vector.load %arg3[%c0_8, %c0_9] : memref<1x128xf32, #tpu.memory_space<vmem>>, vector<1x128xf32>
    %18 = arith.mulf %16, %17 : vector<1x128xf32>
    %c0_10 = arith.constant 0 : index
    %c0_11 = arith.constant 0 : index
    %19 = vector.load %arg4[%c0_10, %c0_11] : memref<1x128xf32, #tpu.memory_space<vmem>>, vector<1x128xf32>
    %20 = arith.mulf %9, %18 : vector<1x128xf32>
    %21 = arith.subf %19, %20 : vector<1x128xf32>
    %22 = vector.broadcast %18 : vector<1x128xf32> to vector<1928x128xf32>
    %23 = arith.mulf %2, %22 : vector<1928x128xf32>
    %24 = vector.broadcast %21 : vector<1x128xf32> to vector<1928x128xf32>
    %25 = arith.addf %23, %24 : vector<1928x128xf32>
    %c0_12 = arith.constant 0 : index
    %c0_13 = arith.constant 0 : index
    %26 = vector.load %arg5[%c0_12, %c0_13] : memref<1928x128xf32, #tpu.memory_space<vmem>>, vector<1928x128xf32>
    tpu.vector_store %arg5[%c0_12, %c0_13], %25 {strides = array<i32>} : memref<1928x128xf32, #tpu.memory_space<vmem>>, vector<1928x128xf32>,
    return
  }
  func.func @transform_0(%arg0: i32) -> (i32, i32) {
    %c0_i32 = arith.constant 0 : i32
    %c0_i32_0 = arith.constant 0 : i32
    %c0_i32_1 = arith.constant 0 : i32
    return %c0_i32, %c0_i32_0 : i32, i32
  }
  func.func @transform_1(%arg0: i32) -> (i32, i32) {
    %c0_i32 = arith.constant 0 : i32
    %c0_i32_0 = arith.constant 0 : i32
    return %c0_i32, %arg0 : i32, i32
  }
  func.func @transform_2(%arg0: i32) -> (i32, i32) {
    %c0_i32 = arith.constant 0 : i32
    %c0_i32_0 = arith.constant 0 : i32
    return %c0_i32, %arg0 : i32, i32
  }
  func.func @transform_3(%arg0: i32) -> (i32, i32) {
    %c0_i32 = arith.constant 0 : i32
    %c0_i32_0 = arith.constant 0 : i32
    return %c0_i32, %arg0 : i32, i32
  }
  func.func @transform_4(%arg0: i32) -> (i32, i32) {
    %c0_i32 = arith.constant 0 : i32
    %c0_i32_0 = arith.constant 0 : i32
    return %c0_i32, %arg0 : i32, i32
  }
}

</mosaic_0001>

<llo_original>
// kernel: decbr2d_forward.1
$region0: #{decbr2d_forward.1}
  #allocation0 [shape = 'u32[]', space=smem, size = 0x4, offset = 0x4, fixed_abs, tag = 'smem constant byte address 0x4 - core index']
  #allocation1 [shape = 'u32[72,128]{1,0:T(1,128)}', space=vmem, size = 0x9000, scoped, tag = 'internal scratch']
  %s0 = inlined_call_operand.vmem [shape: bf16[1928,128], index: 0, kind: input, shape index: {}]
  %s1 = inlined_call_operand.vmem [shape: bf16[128,128], index: 1, kind: input, shape index: {}]
  %s2 = inlined_call_operand.vmem [shape: f32[1,128], index: 2, kind: input, shape index: {}]
  %s3 = inlined_call_operand.vmem [shape: f32[1,128], index: 3, kind: input, shape index: {}]
  %s4 = inlined_call_operand.vmem [shape: f32[1928,128], index: 4, kind: output, shape index: {}]
  %s5 = sld [smem:[#allocation0]]
  $region26: #{decbr2d_forward.1} parent=0
    _
  %s7 = ssub.s32 1, %s5
  %s8 = scalar_select 0, %s7, %s5
  // Predicated region
  $region2: #{decbr2d_forward.1} parent=0 // pred_check
    _
  $region3: #{decbr2d_forward.1} parent=0 // pred_check_branch
    %10 = sbr.rel (0) target = $region5
  $region4: #{decbr2d_forward.1} parent=0 // pred_region
    _
  $region5: #{decbr2d_forward.1} parent=0 // pred_fallthru
    _
  // Predicated region
  $region6: #{decbr2d_forward.1} parent=0 // pred_check
    _
  $region7: #{decbr2d_forward.1} parent=0 // pred_check_branch
    %12 = sbr.rel (0) target = $region9
  $region8: #{decbr2d_forward.1} parent=0 // pred_region
    _
  $region9: #{decbr2d_forward.1} parent=0 // pred_fallthru
    _
  // Predicated region
  $region10: #{decbr2d_forward.1} parent=0 // pred_check
    _
  $region11: #{decbr2d_forward.1} parent=0 // pred_check_branch
    %14 = sbr.rel (0) target = $region13
  $region12: #{decbr2d_forward.1} parent=0 // pred_region
    _
  $region13: #{decbr2d_forward.1} parent=0 // pred_fallthru
    _
  // Predicated region
  $region14: #{decbr2d_forward.1} parent=0 // pred_check
    _
  $region15: #{decbr2d_forward.1} parent=0 // pred_check_branch
    %16 = sbr.rel (0) target = $region17
  $region16: #{decbr2d_forward.1} parent=0 // pred_region
    _
  $region17: #{decbr2d_forward.1} parent=0 // pred_fallthru
    _
  %v17 = vld [vmem:[%s0] sm:$0xf]
  %v18 = vld [vmem:[%s0 + $0x4] sm:$0xf]
  %v19 = vld [vmem:[%s0 + $0x8] sm:$0xf]
  %v20 = vld [vmem:[%s0 + $0xc] sm:$0xf]
  %v21 = vld [vmem:[%s0 + $0x10] sm:$0xf]
  %v22 = vld [vmem:[%s0 + $0x14] sm:$0xf]
  %v23 = vld [vmem:[%s0 + $0x18] sm:$0xf]
  %v24 = vld [vmem:[%s0 + $0x1c] sm:$0xf]
  %v25 = vld [vmem:[%s0 + $0x20] sm:$0xf]
  %v26 = vld [vmem:[%s0 + $0x24] sm:$0xf]
  %v27 = vld [vmem:[%s0 + $0x28] sm:$0xf]
  %v28 = vld [vmem:[%s0 + $0x2c] sm:$0xf]
  %v29 = vld [vmem:[%s0 + $0x30] sm:$0xf]
  %v30 = vld [vmem:[%s0 + $0x34] sm:$0xf]
  %v31 = vld [vmem:[%s0 + $0x38] sm:$0xf]
  %v32 = vld [vmem:[%s0 + $0x3c] sm:$0xf]
  %v33 = vld [vmem:[%s0 + $0x40] sm:$0xf]
  %v34 = vld [vmem:[%s0 + $0x44] sm:$0xf]
  %v35 = vld [vmem:[%s0 + $0x48] sm:$0xf]
  %v36 = vld [vmem:[%s0 + $0x4c] sm:$0xf]
  %v37 = vld [vmem:[%s0 + $0x50] sm:$0xf]
  %v38 = vld [vmem:[%s0 + $0x54] sm:$0xf]
  %v39 = vld [vmem:[%s0 + $0x58] sm:$0xf]
  %v40 = vld [vmem:[%s0 + $0x5c] sm:$0xf]
  %v41 = vld [vmem:[%s0 + $0x60] sm:$0xf]
  %v42 = vld [vmem:[%s0 + $0x64] sm:$0xf]
  %v43 = vld [vmem:[%s0 + $0x68] sm:$0xf]
  %v44 = vld [vmem:[%s0 + $0x6c] sm:$0xf]
  %v45 = vld [vmem:[%s0 + $0x70] sm:$0xf]
  %v46 = vld [vmem:[%s0 + $0x74] sm:$0xf]
  %v47 = vld [vmem:[%s0 + $0x78] sm:$0xf]
  %v48 = vld [vmem:[%s0 + $0x7c] sm:$0xf]
  %v49 = vld [vmem:[%s0 + $0x80] sm:$0xf]
  %v50 = vld [vmem:[%s0 + $0x84] sm:$0xf]
  %v51 = vld [vmem:[%s0 + $0x88] sm:$0xf]
  %v52 = vld [vmem:[%s0 + $0x8c] sm:$0xf]
  %v53 = vld [vmem:[%s0 + $0x90] sm:$0xf]
  %v54 = vld [vmem:[%s0 + $0x94] sm:$0xf]
  %v55 = vld [vmem:[%s0 + $0x98] sm:$0xf]
  %v56 = vld [vmem:[%s0 + $0x9c] sm:$0xf]
  %v57 = vld [vmem:[%s0 + $0xa0] sm:$0xf]
  %v58 = vld [vmem:[%s0 + $0xa4] sm:$0xf]
  %v59 = vld [vmem:[%s0 + $0xa8] sm:$0xf]
  %v60 = vld [vmem:[%s0 + $0xac] sm:$0xf]
  %v61 = vld [vmem:[%s0 + $0xb0] sm:$0xf]
  %v62 = vld [vmem:[%s0 + $0xb4] sm:$0xf]
  %v63 = vld [vmem:[%s0 + $0xb8] sm:$0xf]
  %v64 = vld [vmem:[%s0 + $0xbc] sm:$0xf]
  %v65 = vld [vmem:[%s0 + $0xc0] sm:$0xf]
  %v66 = vld [vmem:[%s0 + $0xc4] sm:$0xf]
  %v67 = vld [vmem:[%s0 + $0xc8] sm:$0xf]
  %v68 = vld [vmem:[%s0 + $0xcc] sm:$0xf]
  %v69 = vld [vmem:[%s0 + $0xd0] sm:$0xf]
  %v70 = vld [vmem:[%s0 + $0xd4] sm:$0xf]
  %v71 = vld [vmem:[%s0 + $0xd8] sm:$0xf]
  %v72 = vld [vmem:[%s0 + $0xdc] sm:$0xf]
  %v73 = vld [vmem:[%s0 + $0xe0] sm:$0xf]
  %v74 = vld [vmem:[%s0 + $0xe4] sm:$0xf]
  %v75 = vld [vmem:[%s0 + $0xe8] sm:$0xf]
  %v76 = vld [vmem:[%s0 + $0xec] sm:$0xf]
  %v77 = vld [vmem:[%s0 + $0xf0] sm:$0xf]
  %v78 = vld [vmem:[%s0 + $0xf4] sm:$0xf]
  %v79 = vld [vmem:[%s0 + $0xf8] sm:$0xf]
  %v80 = vld [vmem:[%s0 + $0xfc] sm:$0xf]
  %v81 = vld [vmem:[%s0 + $0x100] sm:$0xf]
  %v82 = vld [vmem:[%s0 + $0x104] sm:$0xf]
  %v83 = vld [vmem:[%s0 + $0x108] sm:$0xf]
  %v84 = vld [vmem:[%s0 + $0x10c] sm:$0xf]
  %v85 = vld [vmem:[%s0 + $0x110] sm:$0xf]
  %v86 = vld [vmem:[%s0 + $0x114] sm:$0xf]
  %v87 = vld [vmem:[%s0 + $0x118] sm:$0xf]
  %v88 = vld [vmem:[%s0 + $0x11c] sm:$0xf]
  %v89 = vld [vmem:[%s0 + $0x120] sm:$0xf]
  %v90 = vld [vmem:[%s0 + $0x124] sm:$0xf]
  %v91 = vld [vmem:[%s0 + $0x128] sm:$0xf]
  %v92 = vld [vmem:[%s0 + $0x12c] sm:$0xf]
  %v93 = vld [vmem:[%s0 + $0x130] sm:$0xf]
  %v94 = vld [vmem:[%s0 + $0x134] sm:$0xf]
  %v95 = vld [vmem:[%s0 + $0x138] sm:$0xf]
  %v96 = vld [vmem:[%s0 + $0x13c] sm:$0xf]
  %v97 = vld [vmem:[%s0 + $0x140] sm:$0xf]
  %v98 = vld [vmem:[%s0 + $0x144] sm:$0xf]
  %v99 = vld [vmem:[%s0 + $0x148] sm:$0xf]
  %v100 = vld [vmem:[%s0 + $0x14c] sm:$0xf]
  %v101 = vld [vmem:[%s0 + $0x150] sm:$0xf]
  %v102 = vld [vmem:[%s0 + $0x154] sm:$0xf]
  %v103 = vld [vmem:[%s0 + $0x158] sm:$0xf]
  %v104 = vld [vmem:[%s0 + $0x15c] sm:$0xf]
  %v105 = vld [vmem:[%s0 + $0x160] sm:$0xf]
  %v106 = vld [vmem:[%s0 + $0x164] sm:$0xf]
  %v107 = vld [vmem:[%s0 + $0x168] sm:$0xf]
  %v108 = vld [vmem:[%s0 + $0x16c] sm:$0xf]
  %v109 = vld [vmem:[%s0 + $0x170] sm:$0xf]
  %v110 = vld [vmem:[%s0 + $0x174] sm:$0xf]
  %v111 = vld [vmem:[%s0 + $0x178] sm:$0xf]
  %v112 = vld [vmem:[%s0 + $0x17c] sm:$0xf]
  %v113 = vld [vmem:[%s0 + $0x180] sm:$0xf]
  %v114 = vld [vmem:[%s0 + $0x184] sm:$0xf]
  %v115 = vld [vmem:[%s0 + $0x188] sm:$0xf]
  %v116 = vld [vmem:[%s0 + $0x18c] sm:$0xf]
  %v117 = vld [vmem:[%s0 + $0x190] sm:$0xf]
  %v118 = vld [vmem:[%s0 + $0x194] sm:$0xf]
  %v119 = vld [vmem:[%s0 + $0x198] sm:$0xf]
  %v120 = vld [vmem:[%s0 + $0x19c] sm:$0xf]
  %v121 = vld [vmem:[%s0 + $0x1a0] sm:$0xf]
  %v122 = vld [vmem:[%s0 + $0x1a4] sm:$0xf]
  %v123 = vld [vmem:[%s0 + $0x1a8] sm:$0xf]
  %v124 = vld [vmem:[%s0 + $0x1ac] sm:$0xf]
  %v125 = vld [vmem:[%s0 + $0x1b0] sm:$0xf]
  %v126 = vld [vmem:[%s0 + $0x1b4] sm:$0xf]
  %v127 = vld [vmem:[%s0 + $0x1b8] sm:$0xf]
  %v128 = vld [vmem:[%s0 + $0x1bc] sm:$0xf]
  %v129 = vld [vmem:[%s0 + $0x1c0] sm:$0xf]
  %v130 = vld [vmem:[%s0 + $0x1c4] sm:$0xf]
  %v131 = vld [vmem:[%s0 + $0x1c8] sm:$0xf]
  %v132 = vld [vmem:[%s0 + $0x1cc] sm:$0xf]
  %v133 = vld [vmem:[%s0 + $0x1d0] sm:$0xf]
  %v134 = vld [vmem:[%s0 + $0x1d4] sm:$0xf]
  %v135 = vld [vmem:[%s0 + $0x1d8] sm:$0xf]
  %v136 = vld [vmem:[%s0 + $0x1dc] sm:$0xf]
  %v137 = vld [vmem:[%s0 + $0x1e0] sm:$0xf]
  %v138 = vld [vmem:[%s0 + $0x1e4] sm:$0xf]
  %v139 = vld [vmem:[%s0 + $0x1e8] sm:$0xf]
  %v140 = vld [vmem:[%s0 + $0x1ec] sm:$0xf]
  %v141 = vld [vmem:[%s0 + $0x1f0] sm:$0xf]
  %v142 = vld [vmem:[%s0 + $0x1f4] sm:$0xf]
  %v143 = vld [vmem:[%s0 + $0x1f8] sm:$0xf]
  %v144 = vld [vmem:[%s0 + $0x1fc] sm:$0xf]
  %v145 = vld [vmem:[%s0 + $0x200] sm:$0xf]
  %v146 = vld [vmem:[%s0 + $0x204] sm:$0xf]
  %v147 = vld [vmem:[%s0 + $0x208] sm:$0xf]
  %v148 = vld [vmem:[%s0 + $0x20c] sm:$0xf]
  %v149 = vld [vmem:[%s0 + $0x210] sm:$0xf]
  %v150 = vld [vmem:[%s0 + $0x214] sm:$0xf]
  %v151 = vld [vmem:[%s0 + $0x218] sm:$0xf]
  %v152 = vld [vmem:[%s0 + $0x21c] sm:$0xf]
  %v153 = vld [vmem:[%s0 + $0x220] sm:$0xf]
  %v154 = vld [vmem:[%s0 + $0x224] sm:$0xf]
  %v155 = vld [vmem:[%s0 + $0x228] sm:$0xf]
  %v156 = vld [vmem:[%s0 + $0x22c] sm:$0xf]
  %v157 = vld [vmem:[%s0 + $0x230] sm:$0xf]
  %v158 = vld [vmem:[%s0 + $0x234] sm:$0xf]
  %v159 = vld [vmem:[%s0 + $0x238] sm:$0xf]
  %v160 = vld [vmem:[%s0 + $0x23c] sm:$0xf]
  %v161 = vld [vmem:[%s0 + $0x240] sm:$0xf]
  %v162 = vld [vmem:[%s0 + $0x244] sm:$0xf]
  %v163 = vld [vmem:[%s0 + $0x248] sm:$0xf]
  %v164 = vld [vmem:[%s0 + $0x24c] sm:$0xf]
  %v165 = vld [vmem:[%s0 + $0x250] sm:$0xf]
  %v166 = vld [vmem:[%s0 + $0x254] sm:$0xf]
  %v167 = vld [vmem:[%s0 + $0x258] sm:$0xf]
  %v168 = vld [vmem:[%s0 + $0x25c] sm:$0xf]
  %v169 = vld [vmem:[%s0 + $0x260] sm:$0xf]
  %v170 = vld [vmem:[%s0 + $0x264] sm:$0xf]
  %v171 = vld [vmem:[%s0 + $0x268] sm:$0xf]
  %v172 = vld [vmem:[%s0 + $0x26c] sm:$0xf]
  %v173 = vld [vmem:[%s0 + $0x270] sm:$0xf]
  %v174 = vld [vmem:[%s0 + $0x274] sm:$0xf]
  %v175 = vld [vmem:[%s0 + $0x278] sm:$0xf]
  %v176 = vld [vmem:[%s0 + $0x27c] sm:$0xf]
  %v177 = vld [vmem:[%s0 + $0x280] sm:$0xf]
  %v178 = vld [vmem:[%s0 + $0x284] sm:$0xf]
  %v179 = vld [vmem:[%s0 + $0x288] sm:$0xf]
  %v180 = vld [vmem:[%s0 + $0x28c] sm:$0xf]
  %v181 = vld [vmem:[%s0 + $0x290] sm:$0xf]
  %v182 = vld [vmem:[%s0 + $0x294] sm:$0xf]
  %v183 = vld [vmem:[%s0 + $0x298] sm:$0xf]
  %v184 = vld [vmem:[%s0 + $0x29c] sm:$0xf]
  %v185 = vld [vmem:[%s0 + $0x2a0] sm:$0xf]
  %v186 = vld [vmem:[%s0 + $0x2a4] sm:$0xf]
  %v187 = vld [vmem:[%s0 + $0x2a8] sm:$0xf]
  %v188 = vld [vmem:[%s0 + $0x2ac] sm:$0xf]
  %v189 = vld [vmem:[%s0 + $0x2b0] sm:$0xf]
  %v190 = vld [vmem:[%s0 + $0x2b4] sm:$0xf]
  %v191 = vld [vmem:[%s0 + $0x2b8] sm:$0xf]
  %v192 = vld [vmem:[%s0 + $0x2bc] sm:$0xf]
  %v193 = vld [vmem:[%s0 + $0x2c0] sm:$0xf]
  %v194 = vld [vmem:[%s0 + $0x2c4] sm:$0xf]
  %v195 = vld [vmem:[%s0 + $0x2c8] sm:$0xf]
  %v196 = vld [vmem:[%s0 + $0x2cc] sm:$0xf]
  %v197 = vld [vmem:[%s0 + $0x2d0] sm:$0xf]
  %v198 = vld [vmem:[%s0 + $0x2d4] sm:$0xf]
  %v199 = vld [vmem:[%s0 + $0x2d8] sm:$0xf]
  %v200 = vld [vmem:[%s0 + $0x2dc] sm:$0xf]
  %v201 = vld [vmem:[%s0 + $0x2e0] sm:$0xf]
  %v202 = vld [vmem:[%s0 + $0x2e4] sm:$0xf]
  %v203 = vld [vmem:[%s0 + $0x2e8] sm:$0xf]
  %v204 = vld [vmem:[%s0 + $0x2ec] sm:$0xf]
  %v205 = vld [vmem:[%s0 + $0x2f0] sm:$0xf]
  %v206 = vld [vmem:[%s0 + $0x2f4] sm:$0xf]
  %v207 = vld [vmem:[%s0 + $0x2f8] sm:$0xf]
  %v208 = vld [vmem:[%s0 + $0x2fc] sm:$0xf]
  %v209 = vld [vmem:[%s0 + $0x300] sm:$0xf]
  %v210 = vld [vmem:[%s0 + $0x304] sm:$0xf]
  %v211 = vld [vmem:[%s0 + $0x308] sm:$0xf]
  %v212 = vld [vmem:[%s0 + $0x30c] sm:$0xf]
  %v213 = vld [vmem:[%s0 + $0x310] sm:$0xf]
  %v214 = vld [vmem:[%s0 + $0x314] sm:$0xf]
  %v215 = vld [vmem:[%s0 + $0x318] sm:$0xf]
  %v216 = vld [vmem:[%s0 + $0x31c] sm:$0xf]
  %v217 = vld [vmem:[%s0 + $0x320] sm:$0xf]
  %v218 = vld [vmem:[%s0 + $0x324] sm:$0xf]
  %v219 = vld [vmem:[%s0 + $0x328] sm:$0xf]
  %v220 = vld [vmem:[%s0 + $0x32c] sm:$0xf]
  %v221 = vld [vmem:[%s0 + $0x330] sm:$0xf]
  %v222 = vld [vmem:[%s0 + $0x334] sm:$0xf]
  %v223 = vld [vmem:[%s0 + $0x338] sm:$0xf]
  %v224 = vld [vmem:[%s0 + $0x33c] sm:$0xf]
  %v225 = vld [vmem:[%s0 + $0x340] sm:$0xf]
  %v226 = vld [vmem:[%s0 + $0x344] sm:$0xf]
  %v227 = vld [vmem:[%s0 + $0x348] sm:$0xf]
  %v228 = vld [vmem:[%s0 + $0x34c] sm:$0xf]
  %v229 = vld [vmem:[%s0 + $0x350] sm:$0xf]
  %v230 = vld [vmem:[%s0 + $0x354] sm:$0xf]
  %v231 = vld [vmem:[%s0 + $0x358] sm:$0xf]
  %v232 = vld [vmem:[%s0 + $0x35c] sm:$0xf]
  %v233 = vld [vmem:[%s0 + $0x360] sm:$0xf]
  %v234 = vld [vmem:[%s0 + $0x364] sm:$0xf]
  %v235 = vld [vmem:[%s0 + $0x368] sm:$0xf]
  %v236 = vld [vmem:[%s0 + $0x36c] sm:$0xf]
  %v237 = vld [vmem:[%s0 + $0x370] sm:$0xf]
  %v238 = vld [vmem:[%s0 + $0x374] sm:$0xf]
  %v239 = vld [vmem:[%s0 + $0x378] sm:$0xf]
  %v240 = vld [vmem:[%s0 + $0x37c] sm:$0xf]
  %v241 = vld [vmem:[%s0 + $0x380] sm:$0xf]
  %v242 = vld [vmem:[%s0 + $0x384] sm:$0xf]
  %v243 = vld [vmem:[%s0 + $0x388] sm:$0xf]
  %v244 = vld [vmem:[%s0 + $0x38c] sm:$0xf]
  %v245 = vld [vmem:[%s0 + $0x390] sm:$0xf]
  %v246 = vld [vmem:[%s0 + $0x394] sm:$0xf]
  %v247 = vld [vmem:[%s0 + $0x398] sm:$0xf]
  %v248 = vld [vmem:[%s0 + $0x39c] sm:$0xf]
  %v249 = vld [vmem:[%s0 + $0x3a0] sm:$0xf]
  %v250 = vld [vmem:[%s0 + $0x3a4] sm:$0xf]
  %v251 = vld [vmem:[%s0 + $0x3a8] sm:$0xf]
  %v252 = vld [vmem:[%s0 + $0x3ac] sm:$0xf]
  %v253 = vld [vmem:[%s0 + $0x3b0] sm:$0xf]
  %v254 = vld [vmem:[%s0 + $0x3b4] sm:$0xf]
  %v255 = vld [vmem:[%s0 + $0x3b8] sm:$0xf]
  %v256 = vld [vmem:[%s0 + $0x3bc] sm:$0xf]
  %v257 = vld [vmem:[%s0 + $0x3c0] sm:$0xf]
  %v258 = vld [vmem:[%s1] sm:$0xf]
  %v259 = vld [vmem:[%s1 + $0x4] sm:$0xf]
  %v260 = vld [vmem:[%s1 + $0x8] sm:$0xf]
  %v261 = vld [vmem:[%s1 + $0xc] sm:$0xf]
  %v262 = vld [vmem:[%s1 + $0x10] sm:$0xf]
  %v263 = vld [vmem:[%s1 + $0x14] sm:$0xf]
  %v264 = vld [vmem:[%s1 + $0x18] sm:$0xf]
  %v265 = vld [vmem:[%s1 + $0x1c] sm:$0xf]
  %v266 = vld [vmem:[%s1 + $0x20] sm:$0xf]
  %v267 = vld [vmem:[%s1 + $0x24] sm:$0xf]
  %v268 = vld [vmem:[%s1 + $0x28] sm:$0xf]
  %v269 = vld [vmem:[%s1 + $0x2c] sm:$0xf]
  %v270 = vld [vmem:[%s1 + $0x30] sm:$0xf]
  %v271 = vld [vmem:[%s1 + $0x34] sm:$0xf]
  %v272 = vld [vmem:[%s1 + $0x38] sm:$0xf]
  %v273 = vld [vmem:[%s1 + $0x3c] sm:$0xf]
  %v515 = vunpack.c.l.b16 %v17
  %v516 = vunpack.c.l.b16 %v18
  %v517 = vunpack.c.l.b16 %v19
  %v518 = vunpack.c.l.b16 %v20
  %v519 = vunpack.c.l.b16 %v21
  %v520 = vunpack.c.l.b16 %v22
  %v521 = vunpack.c.l.b16 %v23
  %v522 = vunpack.c.l.b16 %v24
  %v523 = vunpack.c.l.b16 %v25
  %v524 = vunpack.c.l.b16 %v26
  %v525 = vunpack.c.l.b16 %v27
  %v526 = vunpack.c.l.b16 %v28
  %v527 = vunpack.c.l.b16 %v29
  %v528 = vunpack.c.l.b16 %v30
  %v529 = vunpack.c.l.b16 %v31
  %v530 = vunpack.c.l.b16 %v32
  %v531 = vunpack.c.l.b16 %v33
  %v532 = vunpack.c.l.b16 %v34
  %v533 = vunpack.c.l.b16 %v35
  %v534 = vunpack.c.l.b16 %v36
  %v535 = vunpack.c.l.b16 %v37
  %v536 = vunpack.c.l.b16 %v38
  %v537 = vunpack.c.l.b16 %v39
  %v538 = vunpack.c.l.b16 %v40
  %v539 = vunpack.c.l.b16 %v41
  %v540 = vunpack.c.l.b16 %v42
  %v541 = vunpack.c.l.b16 %v43
  %v542 = vunpack.c.l.b16 %v44
  %v543 = vunpack.c.l.b16 %v45
  %v544 = vunpack.c.l.b16 %v46
  %v545 = vunpack.c.l.b16 %v47
  %v546 = vunpack.c.l.b16 %v48
  %v547 = vunpack.c.l.b16 %v49
  %v548 = vunpack.c.l.b16 %v50
  %v549 = vunpack.c.l.b16 %v51
  %v550 = vunpack.c.l.b16 %v52
  %v551 = vunpack.c.l.b16 %v53
  %v552 = vunpack.c.l.b16 %v54
  %v553 = vunpack.c.l.b16 %v55
  %v554 = vunpack.c.l.b16 %v56
  %v555 = vunpack.c.l.b16 %v57
  %v556 = vunpack.c.l.b16 %v58
  %v557 = vunpack.c.l.b16 %v59
  %v558 = vunpack.c.l.b16 %v60
  %v559 = vunpack.c.l.b16 %v61
  %v560 = vunpack.c.l.b16 %v62
  %v561 = vunpack.c.l.b16 %v63
  %v562 = vunpack.c.l.b16 %v64
  %v563 = vunpack.c.l.b16 %v65
  %v564 = vunpack.c.l.b16 %v66
  %v565 = vunpack.c.l.b16 %v67
  %v566 = vunpack.c.l.b16 %v68
  %v567 = vunpack.c.l.b16 %v69
  %v568 = vunpack.c.l.b16 %v70
  %v569 = vunpack.c.l.b16 %v71
  %v570 = vunpack.c.l.b16 %v72
  %v571 = vunpack.c.l.b16 %v73
  %v572 = vunpack.c.l.b16 %v74
  %v573 = vunpack.c.l.b16 %v75
  %v574 = vunpack.c.l.b16 %v76
  %v575 = vunpack.c.l.b16 %v77
  %v576 = vunpack.c.l.b16 %v78
  %v577 = vunpack.c.l.b16 %v79
  %v578 = vunpack.c.l.b16 %v80
  %v579 = vunpack.c.l.b16 %v81
  %v580 = vunpack.c.l.b16 %v82
  %v581 = vunpack.c.l.b16 %v83
  %v582 = vunpack.c.l.b16 %v84
  %v583 = vunpack.c.l.b16 %v85
  %v584 = vunpack.c.l.b16 %v86
  %v585 = vunpack.c.l.b16 %v87
  %v586 = vunpack.c.l.b16 %v88
  %v587 = vunpack.c.l.b16 %v89
  %v588 = vunpack.c.l.b16 %v90
  %v589 = vunpack.c.l.b16 %v91
  %v590 = vunpack.c.l.b16 %v92
  %v591 = vunpack.c.l.b16 %v93
  %v592 = vunpack.c.l.b16 %v94
  %v593 = vunpack.c.l.b16 %v95
  %v594 = vunpack.c.l.b16 %v96
  %v595 = vunpack.c.l.b16 %v97
  %v596 = vunpack.c.l.b16 %v98
  %v597 = vunpack.c.l.b16 %v99
  %v598 = vunpack.c.l.b16 %v100
  %v599 = vunpack.c.l.b16 %v101
  %v600 = vunpack.c.l.b16 %v102
  %v601 = vunpack.c.l.b16 %v103
  %v602 = vunpack.c.l.b16 %v104
  %v603 = vunpack.c.l.b16 %v105
  %v604 = vunpack.c.l.b16 %v106
  %v605 = vunpack.c.l.b16 %v107
  %v606 = vunpack.c.l.b16 %v108
  %v607 = vunpack.c.l.b16 %v109
  %v608 = vunpack.c.l.b16 %v110
  %v609 = vunpack.c.l.b16 %v111
  %v610 = vunpack.c.l.b16 %v112
  %v611 = vunpack.c.l.b16 %v113
  %v612 = vunpack.c.l.b16 %v114
  %v613 = vunpack.c.l.b16 %v115
  %v614 = vunpack.c.l.b16 %v116
  %v615 = vunpack.c.l.b16 %v117
  %v616 = vunpack.c.l.b16 %v118
  %v617 = vunpack.c.l.b16 %v119
  %v618 = vunpack.c.l.b16 %v120
  %v619 = vunpack.c.l.b16 %v121
  %v620 = vunpack.c.l.b16 %v122
  %v621 = vunpack.c.l.b16 %v123
  %v622 = vunpack.c.l.b16 %v124
  %v623 = vunpack.c.l.b16 %v125
  %v624 = vunpack.c.l.b16 %v126
  %v625 = vunpack.c.l.b16 %v127
  %v626 = vunpack.c.l.b16 %v128
  %v627 = vunpack.c.l.b16 %v129
  %v628 = vunpack.c.l.b16 %v130
  %v629 = vunpack.c.l.b16 %v131
  %v630 = vunpack.c.l.b16 %v132
  %v631 = vunpack.c.l.b16 %v133
  %v632 = vunpack.c.l.b16 %v134
  %v633 = vunpack.c.l.b16 %v135
  %v634 = vunpack.c.l.b16 %v136
  %v635 = vunpack.c.l.b16 %v137
  %v636 = vunpack.c.l.b16 %v138
  %v637 = vunpack.c.l.b16 %v139
  %v638 = vunpack.c.l.b16 %v140
  %v639 = vunpack.c.l.b16 %v141
  %v640 = vunpack.c.l.b16 %v142
  %v641 = vunpack.c.l.b16 %v143
  %v642 = vunpack.c.l.b16 %v144
  %v643 = vunpack.c.l.b16 %v145
  %v644 = vunpack.c.l.b16 %v146
  %v645 = vunpack.c.l.b16 %v147
  %v646 = vunpack.c.l.b16 %v148
  %v647 = vunpack.c.l.b16 %v149
  %v648 = vunpack.c.l.b16 %v150
  %v649 = vunpack.c.l.b16 %v151
  %v650 = vunpack.c.l.b16 %v152
  %v651 = vunpack.c.l.b16 %v153
  %v652 = vunpack.c.l.b16 %v154
  %v653 = vunpack.c.l.b16 %v155
  %v654 = vunpack.c.l.b16 %v156
  %v655 = vunpack.c.l.b16 %v157
  %v656 = vunpack.c.l.b16 %v158
  %v657 = vunpack.c.l.b16 %v159
  %v658 = vunpack.c.l.b16 %v160
  %v659 = vunpack.c.l.b16 %v161
  %v660 = vunpack.c.l.b16 %v162
  %v661 = vunpack.c.l.b16 %v163
  %v662 = vunpack.c.l.b16 %v164
  %v663 = vunpack.c.l.b16 %v165
  %v664 = vunpack.c.l.b16 %v166
  %v665 = vunpack.c.l.b16 %v167
  %v666 = vunpack.c.l.b16 %v168
  %v667 = vunpack.c.l.b16 %v169
  %v668 = vunpack.c.l.b16 %v170
  %v669 = vunpack.c.l.b16 %v171
  %v670 = vunpack.c.l.b16 %v172
  %v671 = vunpack.c.l.b16 %v173
  %v672 = vunpack.c.l.b16 %v174
  %v673 = vunpack.c.l.b16 %v175
  %v674 = vunpack.c.l.b16 %v176
  %v675 = vunpack.c.l.b16 %v177
  %v676 = vunpack.c.l.b16 %v178
  %v677 = vunpack.c.l.b16 %v179
  %v678 = vunpack.c.l.b16 %v180
  %v679 = vunpack.c.l.b16 %v181
  %v680 = vunpack.c.l.b16 %v182
  %v681 = vunpack.c.l.b16 %v183
  %v682 = vunpack.c.l.b16 %v184
  %v683 = vunpack.c.l.b16 %v185
  %v684 = vunpack.c.l.b16 %v186
  %v685 = vunpack.c.l.b16 %v187
  %v686 = vunpack.c.l.b16 %v188
  %v687 = vunpack.c.l.b16 %v189
  %v688 = vunpack.c.l.b16 %v190
  %v689 = vunpack.c.l.b16 %v191
  %v690 = vunpack.c.l.b16 %v192
  %v691 = vunpack.c.l.b16 %v193
  %v692 = vunpack.c.l.b16 %v194
  %v693 = vunpack.c.l.b16 %v195
  %v694 = vunpack.c.l.b16 %v196
  %v695 = vunpack.c.l.b16 %v197
  %v696 = vunpack.c.l.b16 %v198
  %v697 = vunpack.c.l.b16 %v199
  %v698 = vunpack.c.l.b16 %v200
  %v699 = vunpack.c.l.b16 %v201
  %v700 = vunpack.c.l.b16 %v202
  %v701 = vunpack.c.l.b16 %v203
  %v702 = vunpack.c.l.b16 %v204
  %v703 = vunpack.c.l.b16 %v205
  %v704 = vunpack.c.l.b16 %v206
  %v705 = vunpack.c.l.b16 %v207
  %v706 = vunpack.c.l.b16 %v208
  %v707 = vunpack.c.l.b16 %v209
  %v708 = vunpack.c.l.b16 %v210
  %v709 = vunpack.c.l.b16 %v211
  %v710 = vunpack.c.l.b16 %v212
  %v711 = vunpack.c.l.b16 %v213
  %v712 = vunpack.c.l.b16 %v214
  %v713 = vunpack.c.l.b16 %v215
  %v714 = vunpack.c.l.b16 %v216
  %v715 = vunpack.c.l.b16 %v217
  %v716 = vunpack.c.l.b16 %v218
  %v717 = vunpack.c.l.b16 %v219
  %v718 = vunpack.c.l.b16 %v220
  %v719 = vunpack.c.l.b16 %v221
  %v720 = vunpack.c.l.b16 %v222
  %v721 = vunpack.c.l.b16 %v223
  %v722 = vunpack.c.l.b16 %v224
  %v723 = vunpack.c.l.b16 %v225
  %v724 = vunpack.c.l.b16 %v226
  %v725 = vunpack.c.l.b16 %v227
  %v726 = vunpack.c.l.b16 %v228
  %v727 = vunpack.c.l.b16 %v229
  %v728 = vunpack.c.l.b16 %v230
  %v729 = vunpack.c.l.b16 %v231
  %v730 = vunpack.c.l.b16 %v232
  %v731 = vunpack.c.l.b16 %v233
  %v732 = vunpack.c.l.b16 %v234
  %v733 = vunpack.c.l.b16 %v235
  %v734 = vunpack.c.l.b16 %v236
  %v735 = vunpack.c.l.b16 %v237
  %v736 = vunpack.c.l.b16 %v238
  %v737 = vunpack.c.l.b16 %v239
  %v738 = vunpack.c.l.b16 %v240
  %v739 = vunpack.c.l.b16 %v241
  %v740 = vunpack.c.l.b16 %v242
  %v741 = vunpack.c.l.b16 %v243
  %v742 = vunpack.c.l.b16 %v244
  %v743 = vunpack.c.l.b16 %v245
  %v744 = vunpack.c.l.b16 %v246
  %v745 = vunpack.c.l.b16 %v247
  %v746 = vunpack.c.l.b16 %v248
  %v747 = vunpack.c.l.b16 %v249
  %v748 = vunpack.c.l.b16 %v250
  %v749 = vunpack.c.l.b16 %v251
  %v750 = vunpack.c.l.b16 %v252
  %v751 = vunpack.c.l.b16 %v253
  %v752 = vunpack.c.l.b16 %v254
  %v753 = vunpack.c.l.b16 %v255
  %v754 = vunpack.c.l.b16 %v256
  %v755 = vunpack.c.l.b16 %v257
  %v756 = vpack.c.b16 %v516, %v515
  %v757 = vpack.c.b16 %v518, %v517
  %v758 = vpack.c.b16 %v520, %v519
  %v759 = vpack.c.b16 %v522, %v521
  %v760 = vpack.c.b16 %v524, %v523
  %v761 = vpack.c.b16 %v526, %v525
  %v762 = vpack.c.b16 %v528, %v527
  %v763 = vpack.c.b16 %v530, %v529
  %v764 = vpack.c.b16 %v532, %v531
  %v765 = vpack.c.b16 %v534, %v533
  %v766 = vpack.c.b16 %v536, %v535
  %v767 = vpack.c.b16 %v538, %v537
  %v768 = vpack.c.b16 %v540, %v539
  %v769 = vpack.c.b16 %v542, %v541
  %v770 = vpack.c.b16 %v544, %v543
  %v771 = vpack.c.b16 %v546, %v545
  %v772 = vpack.c.b16 %v548, %v547
  %v773 = vpack.c.b16 %v550, %v549
  %v774 = vpack.c.b16 %v552, %v551
  %v775 = vpack.c.b16 %v554, %v553
  %v776 = vpack.c.b16 %v556, %v555
  %v777 = vpack.c.b16 %v558, %v557
  %v778 = vpack.c.b16 %v560, %v559
  %v779 = vpack.c.b16 %v562, %v561
  %v780 = vpack.c.b16 %v564, %v563
  %v781 = vpack.c.b16 %v566, %v565
  %v782 = vpack.c.b16 %v568, %v567
  %v783 = vpack.c.b16 %v570, %v569
  %v784 = vpack.c.b16 %v572, %v571
  %v785 = vpack.c.b16 %v574, %v573
  %v786 = vpack.c.b16 %v576, %v575
  %v787 = vpack.c.b16 %v578, %v577
  %v788 = vpack.c.b16 %v580, %v579
  %v789 = vpack.c.b16 %v582, %v581
  %v790 = vpack.c.b16 %v584, %v583
  %v791 = vpack.c.b16 %v586, %v585
  %v792 = vpack.c.b16 %v588, %v587
  %v793 = vpack.c.b16 %v590, %v589
  %v794 = vpack.c.b16 %v592, %v591
  %v795 = vpack.c.b16 %v594, %v593
  %v796 = vpack.c.b16 %v596, %v595
  %v797 = vpack.c.b16 %v598, %v597
  %v798 = vpack.c.b16 %v600, %v599
  %v799 = vpack.c.b16 %v602, %v601
  %v800 = vpack.c.b16 %v604, %v603
  %v801 = vpack.c.b16 %v606, %v605
  %v802 = vpack.c.b16 %v608, %v607
  %v803 = vpack.c.b16 %v610, %v609
  %v804 = vpack.c.b16 %v612, %v611
  %v805 = vpack.c.b16 %v614, %v613
  %v806 = vpack.c.b16 %v616, %v615
  %v807 = vpack.c.b16 %v618, %v617
  %v808 = vpack.c.b16 %v620, %v619
  %v809 = vpack.c.b16 %v622, %v621
  %v810 = vpack.c.b16 %v624, %v623
  %v811 = vpack.c.b16 %v626, %v625
  %v812 = vpack.c.b16 %v628, %v627
  %v813 = vpack.c.b16 %v630, %v629
  %v814 = vpack.c.b16 %v632, %v631
  %v815 = vpack.c.b16 %v634, %v633
  %v816 = vpack.c.b16 %v636, %v635
  %v817 = vpack.c.b16 %v638, %v637
  %v818 = vpack.c.b16 %v640, %v639
  %v819 = vpack.c.b16 %v642, %v641
  %v820 = vpack.c.b16 %v644, %v643
  %v821 = vpack.c.b16 %v646, %v645
  %v822 = vpack.c.b16 %v648, %v647
  %v823 = vpack.c.b16 %v650, %v649
  %v824 = vpack.c.b16 %v652, %v651
  %v825 = vpack.c.b16 %v654, %v653
  %v826 = vpack.c.b16 %v656, %v655
  %v827 = vpack.c.b16 %v658, %v657
  %v828 = vpack.c.b16 %v660, %v659
  %v829 = vpack.c.b16 %v662, %v661
  %v830 = vpack.c.b16 %v664, %v663
  %v831 = vpack.c.b16 %v666, %v665
  %v832 = vpack.c.b16 %v668, %v667
  %v833 = vpack.c.b16 %v670, %v669
  %v834 = vpack.c.b16 %v672, %v671
  %v835 = vpack.c.b16 %v674, %v673
  %v836 = vpack.c.b16 %v676, %v675
  %v837 = vpack.c.b16 %v678, %v677
  %v838 = vpack.c.b16 %v680, %v679
  %v839 = vpack.c.b16 %v682, %v681
  %v840 = vpack.c.b16 %v684, %v683
  %v841 = vpack.c.b16 %v686, %v685
  %v842 = vpack.c.b16 %v688, %v687
  %v843 = vpack.c.b16 %v690, %v689
  %v844 = vpack.c.b16 %v692, %v691
  %v845 = vpack.c.b16 %v694, %v693
  %v846 = vpack.c.b16 %v696, %v695
  %v847 = vpack.c.b16 %v698, %v697
  %v848 = vpack.c.b16 %v700, %v699
  %v849 = vpack.c.b16 %v702, %v701
  %v850 = vpack.c.b16 %v704, %v703
  %v851 = vpack.c.b16 %v706, %v705
  %v852 = vpack.c.b16 %v708, %v707
  %v853 = vpack.c.b16 %v710, %v709
  %v854 = vpack.c.b16 %v712, %v711
  %v855 = vpack.c.b16 %v714, %v713
  %v856 = vpack.c.b16 %v716, %v715
  %v857 = vpack.c.b16 %v718, %v717
  %v858 = vpack.c.b16 %v720, %v719
  %v859 = vpack.c.b16 %v722, %v721
  %v860 = vpack.c.b16 %v724, %v723
  %v861 = vpack.c.b16 %v726, %v725
  %v862 = vpack.c.b16 %v728, %v727
  %v863 = vpack.c.b16 %v730, %v729
  %v864 = vpack.c.b16 %v732, %v731
  %v865 = vpack.c.b16 %v734, %v733
  %v866 = vpack.c.b16 %v736, %v735
  %v867 = vpack.c.b16 %v738, %v737
  %v868 = vpack.c.b16 %v740, %v739
  %v869 = vpack.c.b16 %v742, %v741
  %v870 = vpack.c.b16 %v744, %v743
  %v871 = vpack.c.b16 %v746, %v745
  %v872 = vpack.c.b16 %v748, %v747
  %v873 = vpack.c.b16 %v750, %v749
  %v874 = vpack.c.b16 %v752, %v751
  %v875 = vpack.c.b16 %v754, %v753
  %v876 = vpack.c.b16 %v755, %v755
  %v1014 = vunpack.c.l.b16 %v258
  %v1015 = vunpack.c.l.b16 %v259
  %v1016 = vunpack.c.l.b16 %v260
  %v1017 = vunpack.c.l.b16 %v261
  %v1018 = vunpack.c.l.b16 %v262
  %v1019 = vunpack.c.l.b16 %v263
  %v1020 = vunpack.c.l.b16 %v264
  %v1021 = vunpack.c.l.b16 %v265
  %v1022 = vunpack.c.l.b16 %v266
  %v1023 = vunpack.c.l.b16 %v267
  %v1024 = vunpack.c.l.b16 %v268
  %v1025 = vunpack.c.l.b16 %v269
  %v1026 = vunpack.c.l.b16 %v270
  %v1027 = vunpack.c.l.b16 %v271
  %v1028 = vunpack.c.l.b16 %v272
  %v1029 = vunpack.c.l.b16 %v273
  %v1030 = vpack.c.b16 %v1015, %v1014
  %v1031 = vpack.c.b16 %v1017, %v1016
  %v1032 = vpack.c.b16 %v1019, %v1018
  %v1033 = vpack.c.b16 %v1021, %v1020
  %v1034 = vpack.c.b16 %v1023, %v1022
  %v1035 = vpack.c.b16 %v1025, %v1024
  %v1036 = vpack.c.b16 %v1027, %v1026
  %v1037 = vpack.c.b16 %v1029, %v1028
  %1046 = vmatpush.bf16.msra.mxu0 %v1037
  %1047 = vmatpush.bf16.msra.mxu0 %v1036
  %1048 = vmatpush.bf16.msra.mxu0 %v1035
  %1049 = vmatpush.bf16.msra.mxu0 %v1034
  %1050 = vmatpush.bf16.msra.mxu0 %v1033
  %1051 = vmatpush.bf16.msra.mxu0 %v1032
  %1052 = vmatpush.bf16.msra.mxu0 %v1031
  %1053 = vmatpush.bf16.msra.mxu0 %v1030
  %1054 = vmatmul.bf16.gmra.mxu0 %v756
  %v1055 = vpop.f32.mrf.mxu0
  %v1056 = vadd.f32 0.0, %v1055
  %v1057 = vpop.f32.mrf.mxu0
  %v1058 = vadd.f32 0.0, %v1057
  %1059 = vmatmul.bf16.gmra.mxu0 %v757
  %v1060 = vpop.f32.mrf.mxu0
  %v1061 = vadd.f32 0.0, %v1060
  %v1062 = vpop.f32.mrf.mxu0
  %v1063 = vadd.f32 0.0, %v1062
  %1064 = vmatmul.bf16.gmra.mxu0 %v758
  %v1065 = vpop.f32.mrf.mxu0
  %v1066 = vadd.f32 0.0, %v1065
  %v1067 = vpop.f32.mrf.mxu0
  %v1068 = vadd.f32 0.0, %v1067
  %1069 = vmatmul.bf16.gmra.mxu0 %v759
  %v1070 = vpop.f32.mrf.mxu0
  %v1071 = vadd.f32 0.0, %v1070
  %v1072 = vpop.f32.mrf.mxu0
  %v1073 = vadd.f32 0.0, %v1072
  %1074 = vmatmul.bf16.gmra.mxu0 %v760
  %v1075 = vpop.f32.mrf.mxu0
  %v1076 = vadd.f32 0.0, %v1075
  %v1077 = vpop.f32.mrf.mxu0
  %v1078 = vadd.f32 0.0, %v1077
  %1079 = vmatmul.bf16.gmra.mxu0 %v761
  %v1080 = vpop.f32.mrf.mxu0
  %v1081 = vadd.f32 0.0, %v1080
  %v1082 = vpop.f32.mrf.mxu0
  %v1083 = vadd.f32 0.0, %v1082
  %1084 = vmatmul.bf16.gmra.mxu0 %v762
  %v1085 = vpop.f32.mrf.mxu0
  %v1086 = vadd.f32 0.0, %v1085
  %v1087 = vpop.f32.mrf.mxu0
  %v1088 = vadd.f32 0.0, %v1087
  %1089 = vmatmul.bf16.gmra.mxu0 %v763
  %v1090 = vpop.f32.mrf.mxu0
  %v1091 = vadd.f32 0.0, %v1090
  %v1092 = vpop.f32.mrf.mxu0
  %v1093 = vadd.f32 0.0, %v1092
  %1094 = vmatmul.bf16.gmra.mxu0 %v764
  %v1095 = vpop.f32.mrf.mxu0
  %v1096 = vadd.f32 0.0, %v1095
  %v1097 = vpop.f32.mrf.mxu0
  %v1098 = vadd.f32 0.0, %v1097
  %1099 = vmatmul.bf16.gmra.mxu0 %v765
  %v1100 = vpop.f32.mrf.mxu0
  %v1101 = vadd.f32 0.0, %v1100
  %v1102 = vpop.f32.mrf.mxu0
  %v1103 = vadd.f32 0.0, %v1102
  %1104 = vmatmul.bf16.gmra.mxu0 %v766
  %v1105 = vpop.f32.mrf.mxu0
  %v1106 = vadd.f32 0.0, %v1105
  %v1107 = vpop.f32.mrf.mxu0
  %v1108 = vadd.f32 0.0, %v1107
  %1109 = vmatmul.bf16.gmra.mxu0 %v767
  %v1110 = vpop.f32.mrf.mxu0
  %v1111 = vadd.f32 0.0, %v1110
  %v1112 = vpop.f32.mrf.mxu0
  %v1113 = vadd.f32 0.0, %v1112
  %1114 = vmatmul.bf16.gmra.mxu0 %v768
  %v1115 = vpop.f32.mrf.mxu0
  %v1116 = vadd.f32 0.0, %v1115
  %v1117 = vpop.f32.mrf.mxu0
  %v1118 = vadd.f32 0.0, %v1117
  %1119 = vmatmul.bf16.gmra.mxu0 %v769
  %v1120 = vpop.f32.mrf.mxu0
  %v1121 = vadd.f32 0.0, %v1120
  %v1122 = vpop.f32.mrf.mxu0
  %v1123 = vadd.f32 0.0, %v1122
  %1124 = vmatmul.bf16.gmra.mxu0 %v770
  %v1125 = vpop.f32.mrf.mxu0
  %v1126 = vadd.f32 0.0, %v1125
  %v1127 = vpop.f32.mrf.mxu0
  %v1128 = vadd.f32 0.0, %v1127
  %1129 = vmatmul.bf16.gmra.mxu0 %v771
  %v1130 = vpop.f32.mrf.mxu0
  %v1131 = vadd.f32 0.0, %v1130
  %v1132 = vpop.f32.mrf.mxu0
  %v1133 = vadd.f32 0.0, %v1132
  %1134 = vmatmul.bf16.gmra.mxu0 %v772
  %v1135 = vpop.f32.mrf.mxu0
  %v1136 = vadd.f32 0.0, %v1135
  %v1137 = vpop.f32.mrf.mxu0
  %v1138 = vadd.f32 0.0, %v1137
  %1139 = vmatmul.bf16.gmra.mxu0 %v773
  %v1140 = vpop.f32.mrf.mxu0
  %v1141 = vadd.f32 0.0, %v1140
  %v1142 = vpop.f32.mrf.mxu0
  %v1143 = vadd.f32 0.0, %v1142
  %1144 = vmatmul.bf16.gmra.mxu0 %v774
  %v1145 = vpop.f32.mrf.mxu0
  %v1146 = vadd.f32 0.0, %v1145
  %v1147 = vpop.f32.mrf.mxu0
  %v1148 = vadd.f32 0.0, %v1147
  %1149 = vmatmul.bf16.gmra.mxu0 %v775
  %v1150 = vpop.f32.mrf.mxu0
  %v1151 = vadd.f32 0.0, %v1150
  %v1152 = vpop.f32.mrf.mxu0
  %v1153 = vadd.f32 0.0, %v1152
  %1154 = vmatmul.bf16.gmra.mxu0 %v776
  %v1155 = vpop.f32.mrf.mxu0
  %v1156 = vadd.f32 0.0, %v1155
  %v1157 = vpop.f32.mrf.mxu0
  %v1158 = vadd.f32 0.0, %v1157
  %1159 = vmatmul.bf16.gmra.mxu0 %v777
  %v1160 = vpop.f32.mrf.mxu0
  %v1161 = vadd.f32 0.0, %v1160
  %v1162 = vpop.f32.mrf.mxu0
  %v1163 = vadd.f32 0.0, %v1162
  %1164 = vmatmul.bf16.gmra.mxu0 %v778
  %v1165 = vpop.f32.mrf.mxu0
  %v1166 = vadd.f32 0.0, %v1165
  %v1167 = vpop.f32.mrf.mxu0
  %v1168 = vadd.f32 0.0, %v1167
  %1169 = vmatmul.bf16.gmra.mxu0 %v779
  %v1170 = vpop.f32.mrf.mxu0
  %v1171 = vadd.f32 0.0, %v1170
  %v1172 = vpop.f32.mrf.mxu0
  %v1173 = vadd.f32 0.0, %v1172
  %1174 = vmatmul.bf16.gmra.mxu0 %v780
  %v1175 = vpop.f32.mrf.mxu0
  %v1176 = vadd.f32 0.0, %v1175
  %v1177 = vpop.f32.mrf.mxu0
  %v1178 = vadd.f32 0.0, %v1177
  %1179 = vmatmul.bf16.gmra.mxu0 %v781
  %v1180 = vpop.f32.mrf.mxu0
  %v1181 = vadd.f32 0.0, %v1180
  %v1182 = vpop.f32.mrf.mxu0
  %v1183 = vadd.f32 0.0, %v1182
  %1184 = vmatmul.bf16.gmra.mxu0 %v782
  %v1185 = vpop.f32.mrf.mxu0
  %v1186 = vadd.f32 0.0, %v1185
  %v1187 = vpop.f32.mrf.mxu0
  %v1188 = vadd.f32 0.0, %v1187
  %1189 = vmatmul.bf16.gmra.mxu0 %v783
  %v1190 = vpop.f32.mrf.mxu0
  %v1191 = vadd.f32 0.0, %v1190
  %v1192 = vpop.f32.mrf.mxu0
  %v1193 = vadd.f32 0.0, %v1192
  %1194 = vmatmul.bf16.gmra.mxu0 %v784
  %v1195 = vpop.f32.mrf.mxu0
  %v1196 = vadd.f32 0.0, %v1195
  %v1197 = vpop.f32.mrf.mxu0
  %v1198 = vadd.f32 0.0, %v1197
  %1199 = vmatmul.bf16.gmra.mxu0 %v785
  %v1200 = vpop.f32.mrf.mxu0
  %v1201 = vadd.f32 0.0, %v1200
  %v1202 = vpop.f32.mrf.mxu0
  %v1203 = vadd.f32 0.0, %v1202
  %1204 = vmatmul.bf16.gmra.mxu0 %v786
  %v1205 = vpop.f32.mrf.mxu0
  %v1206 = vadd.f32 0.0, %v1205
  %v1207 = vpop.f32.mrf.mxu0
  %v1208 = vadd.f32 0.0, %v1207
  %1209 = vmatmul.bf16.gmra.mxu0 %v787
  %v1210 = vpop.f32.mrf.mxu0
  %v1211 = vadd.f32 0.0, %v1210
  %v1212 = vpop.f32.mrf.mxu0
  %v1213 = vadd.f32 0.0, %v1212
  %1214 = vmatmul.bf16.gmra.mxu0 %v788
  %v1215 = vpop.f32.mrf.mxu0
  %v1216 = vadd.f32 0.0, %v1215
  %v1217 = vpop.f32.mrf.mxu0
  %v1218 = vadd.f32 0.0, %v1217
  %1219 = vmatmul.bf16.gmra.mxu0 %v789
  %v1220 = vpop.f32.mrf.mxu0
  %v1221 = vadd.f32 0.0, %v1220
  %v1222 = vpop.f32.mrf.mxu0
  %v1223 = vadd.f32 0.0, %v1222
  %1224 = vmatmul.bf16.gmra.mxu0 %v790
  %v1225 = vpop.f32.mrf.mxu0
  %v1226 = vadd.f32 0.0, %v1225
  %v1227 = vpop.f32.mrf.mxu0
  %v1228 = vadd.f32 0.0, %v1227
  %1229 = vmatmul.bf16.gmra.mxu0 %v791
  %v1230 = vpop.f32.mrf.mxu0
  %v1231 = vadd.f32 0.0, %v1230
  %v1232 = vpop.f32.mrf.mxu0
  %v1233 = vadd.f32 0.0, %v1232
  %1234 = vmatmul.bf16.gmra.mxu0 %v792
  %v1235 = vpop.f32.mrf.mxu0
  %v1236 = vadd.f32 0.0, %v1235
  %v1237 = vpop.f32.mrf.mxu0
  %v1238 = vadd.f32 0.0, %v1237
  %1239 = vmatmul.bf16.gmra.mxu0 %v793
  %v1240 = vpop.f32.mrf.mxu0
  %v1241 = vadd.f32 0.0, %v1240
  %v1242 = vpop.f32.mrf.mxu0
  %v1243 = vadd.f32 0.0, %v1242
  %1244 = vmatmul.bf16.gmra.mxu0 %v794
  %v1245 = vpop.f32.mrf.mxu0
  %v1246 = vadd.f32 0.0, %v1245
  %v1247 = vpop.f32.mrf.mxu0
  %v1248 = vadd.f32 0.0, %v1247
  %1249 = vmatmul.bf16.gmra.mxu0 %v795
  %v1250 = vpop.f32.mrf.mxu0
  %v1251 = vadd.f32 0.0, %v1250
  %v1252 = vpop.f32.mrf.mxu0
  %v1253 = vadd.f32 0.0, %v1252
  %1254 = vmatmul.bf16.gmra.mxu0 %v796
  %v1255 = vpop.f32.mrf.mxu0
  %v1256 = vadd.f32 0.0, %v1255
  %v1257 = vpop.f32.mrf.mxu0
  %v1258 = vadd.f32 0.0, %v1257
  %1259 = vmatmul.bf16.gmra.mxu0 %v797
  %v1260 = vpop.f32.mrf.mxu0
  %v1261 = vadd.f32 0.0, %v1260
  %v1262 = vpop.f32.mrf.mxu0
  %v1263 = vadd.f32 0.0, %v1262
  %1264 = vmatmul.bf16.gmra.mxu0 %v798
  %v1265 = vpop.f32.mrf.mxu0
  %v1266 = vadd.f32 0.0, %v1265
  %v1267 = vpop.f32.mrf.mxu0
  %v1268 = vadd.f32 0.0, %v1267
  %1269 = vmatmul.bf16.gmra.mxu0 %v799
  %v1270 = vpop.f32.mrf.mxu0
  %v1271 = vadd.f32 0.0, %v1270
  %v1272 = vpop.f32.mrf.mxu0
  %v1273 = vadd.f32 0.0, %v1272
  %1274 = vmatmul.bf16.gmra.mxu0 %v800
  %v1275 = vpop.f32.mrf.mxu0
  %v1276 = vadd.f32 0.0, %v1275
  %v1277 = vpop.f32.mrf.mxu0
  %v1278 = vadd.f32 0.0, %v1277
  %1279 = vmatmul.bf16.gmra.mxu0 %v801
  %v1280 = vpop.f32.mrf.mxu0
  %v1281 = vadd.f32 0.0, %v1280
  %v1282 = vpop.f32.mrf.mxu0
  %v1283 = vadd.f32 0.0, %v1282
  %1284 = vmatmul.bf16.gmra.mxu0 %v802
  %v1285 = vpop.f32.mrf.mxu0
  %v1286 = vadd.f32 0.0, %v1285
  %v1287 = vpop.f32.mrf.mxu0
  %v1288 = vadd.f32 0.0, %v1287
  %1289 = vmatmul.bf16.gmra.mxu0 %v803
  %v1290 = vpop.f32.mrf.mxu0
  %v1291 = vadd.f32 0.0, %v1290
  %v1292 = vpop.f32.mrf.mxu0
  %v1293 = vadd.f32 0.0, %v1292
  %1294 = vmatmul.bf16.gmra.mxu0 %v804
  %v1295 = vpop.f32.mrf.mxu0
  %v1296 = vadd.f32 0.0, %v1295
  %v1297 = vpop.f32.mrf.mxu0
  %v1298 = vadd.f32 0.0, %v1297
  %1299 = vmatmul.bf16.gmra.mxu0 %v805
  %v1300 = vpop.f32.mrf.mxu0
  %v1301 = vadd.f32 0.0, %v1300
  %v1302 = vpop.f32.mrf.mxu0
  %v1303 = vadd.f32 0.0, %v1302
  %1304 = vmatmul.bf16.gmra.mxu0 %v806
  %v1305 = vpop.f32.mrf.mxu0
  %v1306 = vadd.f32 0.0, %v1305
  %v1307 = vpop.f32.mrf.mxu0
  %v1308 = vadd.f32 0.0, %v1307
  %1309 = vmatmul.bf16.gmra.mxu0 %v807
  %v1310 = vpop.f32.mrf.mxu0
  %v1311 = vadd.f32 0.0, %v1310
  %v1312 = vpop.f32.mrf.mxu0
  %v1313 = vadd.f32 0.0, %v1312
  %1314 = vmatmul.bf16.gmra.mxu0 %v808
  %v1315 = vpop.f32.mrf.mxu0
  %v1316 = vadd.f32 0.0, %v1315
  %v1317 = vpop.f32.mrf.mxu0
  %v1318 = vadd.f32 0.0, %v1317
  %1319 = vmatmul.bf16.gmra.mxu0 %v809
  %v1320 = vpop.f32.mrf.mxu0
  %v1321 = vadd.f32 0.0, %v1320
  %v1322 = vpop.f32.mrf.mxu0
  %v1323 = vadd.f32 0.0, %v1322
  %1324 = vmatmul.bf16.gmra.mxu0 %v810
  %v1325 = vpop.f32.mrf.mxu0
  %v1326 = vadd.f32 0.0, %v1325
  %v1327 = vpop.f32.mrf.mxu0
  %v1328 = vadd.f32 0.0, %v1327
  %1329 = vmatmul.bf16.gmra.mxu0 %v811
  %v1330 = vpop.f32.mrf.mxu0
  %v1331 = vadd.f32 0.0, %v1330
  %v1332 = vpop.f32.mrf.mxu0
  %v1333 = vadd.f32 0.0, %v1332
  %1334 = vmatmul.bf16.gmra.mxu0 %v812
  %v1335 = vpop.f32.mrf.mxu0
  %v1336 = vadd.f32 0.0, %v1335
  %v1337 = vpop.f32.mrf.mxu0
  %v1338 = vadd.f32 0.0, %v1337
  %1339 = vmatmul.bf16.gmra.mxu0 %v813
  %v1340 = vpop.f32.mrf.mxu0
  %v1341 = vadd.f32 0.0, %v1340
  %v1342 = vpop.f32.mrf.mxu0
  %v1343 = vadd.f32 0.0, %v1342
  %1344 = vmatmul.bf16.gmra.mxu0 %v814
  %v1345 = vpop.f32.mrf.mxu0
  %v1346 = vadd.f32 0.0, %v1345
  %v1347 = vpop.f32.mrf.mxu0
  %v1348 = vadd.f32 0.0, %v1347
  %1349 = vmatmul.bf16.gmra.mxu0 %v815
  %v1350 = vpop.f32.mrf.mxu0
  %v1351 = vadd.f32 0.0, %v1350
  %v1352 = vpop.f32.mrf.mxu0
  %v1353 = vadd.f32 0.0, %v1352
  %1354 = vmatmul.bf16.gmra.mxu0 %v816
  %v1355 = vpop.f32.mrf.mxu0
  %v1356 = vadd.f32 0.0, %v1355
  %v1357 = vpop.f32.mrf.mxu0
  %v1358 = vadd.f32 0.0, %v1357
  %1359 = vmatmul.bf16.gmra.mxu0 %v817
  %v1360 = vpop.f32.mrf.mxu0
  %v1361 = vadd.f32 0.0, %v1360
  %v1362 = vpop.f32.mrf.mxu0
  %v1363 = vadd.f32 0.0, %v1362
  %1364 = vmatmul.bf16.gmra.mxu0 %v818
  %v1365 = vpop.f32.mrf.mxu0
  %v1366 = vadd.f32 0.0, %v1365
  %v1367 = vpop.f32.mrf.mxu0
  %v1368 = vadd.f32 0.0, %v1367
  %1369 = vmatmul.bf16.gmra.mxu0 %v819
  %v1370 = vpop.f32.mrf.mxu0
  %v1371 = vadd.f32 0.0, %v1370
  %v1372 = vpop.f32.mrf.mxu0
  %v1373 = vadd.f32 0.0, %v1372
  %1374 = vmatmul.bf16.gmra.mxu0 %v820
  %v1375 = vpop.f32.mrf.mxu0
  %v1376 = vadd.f32 0.0, %v1375
  %v1377 = vpop.f32.mrf.mxu0
  %v1378 = vadd.f32 0.0, %v1377
  %1379 = vmatmul.bf16.gmra.mxu0 %v821
  %v1380 = vpop.f32.mrf.mxu0
  %v1381 = vadd.f32 0.0, %v1380
  %v1382 = vpop.f32.mrf.mxu0
  %v1383 = vadd.f32 0.0, %v1382
  %1384 = vmatmul.bf16.gmra.mxu0 %v822
  %v1385 = vpop.f32.mrf.mxu0
  %v1386 = vadd.f32 0.0, %v1385
  %v1387 = vpop.f32.mrf.mxu0
  %v1388 = vadd.f32 0.0, %v1387
  %1389 = vmatmul.bf16.gmra.mxu0 %v823
  %v1390 = vpop.f32.mrf.mxu0
  %v1391 = vadd.f32 0.0, %v1390
  %v1392 = vpop.f32.mrf.mxu0
  %v1393 = vadd.f32 0.0, %v1392
  %1394 = vmatmul.bf16.gmra.mxu0 %v824
  %v1395 = vpop.f32.mrf.mxu0
  %v1396 = vadd.f32 0.0, %v1395
  %v1397 = vpop.f32.mrf.mxu0
  %v1398 = vadd.f32 0.0, %v1397
  %1399 = vmatmul.bf16.gmra.mxu0 %v825
  %v1400 = vpop.f32.mrf.mxu0
  %v1401 = vadd.f32 0.0, %v1400
  %v1402 = vpop.f32.mrf.mxu0
  %v1403 = vadd.f32 0.0, %v1402
  %1404 = vmatmul.bf16.gmra.mxu0 %v826
  %v1405 = vpop.f32.mrf.mxu0
  %v1406 = vadd.f32 0.0, %v1405
  %v1407 = vpop.f32.mrf.mxu0
  %v1408 = vadd.f32 0.0, %v1407
  %1409 = vmatmul.bf16.gmra.mxu0 %v827
  %v1410 = vpop.f32.mrf.mxu0
  %v1411 = vadd.f32 0.0, %v1410
  %v1412 = vpop.f32.mrf.mxu0
  %v1413 = vadd.f32 0.0, %v1412
  %1414 = vmatmul.bf16.gmra.mxu0 %v828
  %v1415 = vpop.f32.mrf.mxu0
  %v1416 = vadd.f32 0.0, %v1415
  %v1417 = vpop.f32.mrf.mxu0
  %v1418 = vadd.f32 0.0, %v1417
  %1419 = vmatmul.bf16.gmra.mxu0 %v829
  %v1420 = vpop.f32.mrf.mxu0
  %v1421 = vadd.f32 0.0, %v1420
  %v1422 = vpop.f32.mrf.mxu0
  %v1423 = vadd.f32 0.0, %v1422
  %1424 = vmatmul.bf16.gmra.mxu0 %v830
  %v1425 = vpop.f32.mrf.mxu0
  %v1426 = vadd.f32 0.0, %v1425
  %v1427 = vpop.f32.mrf.mxu0
  %v1428 = vadd.f32 0.0, %v1427
  %1429 = vmatmul.bf16.gmra.mxu0 %v831
  %v1430 = vpop.f32.mrf.mxu0
  %v1431 = vadd.f32 0.0, %v1430
  %v1432 = vpop.f32.mrf.mxu0
  %v1433 = vadd.f32 0.0, %v1432
  %1434 = vmatmul.bf16.gmra.mxu0 %v832
  %v1435 = vpop.f32.mrf.mxu0
  %v1436 = vadd.f32 0.0, %v1435
  %v1437 = vpop.f32.mrf.mxu0
  %v1438 = vadd.f32 0.0, %v1437
  %1439 = vmatmul.bf16.gmra.mxu0 %v833
  %v1440 = vpop.f32.mrf.mxu0
  %v1441 = vadd.f32 0.0, %v1440
  %v1442 = vpop.f32.mrf.mxu0
  %v1443 = vadd.f32 0.0, %v1442
  %1444 = vmatmul.bf16.gmra.mxu0 %v834
  %v1445 = vpop.f32.mrf.mxu0
  %v1446 = vadd.f32 0.0, %v1445
  %v1447 = vpop.f32.mrf.mxu0
  %v1448 = vadd.f32 0.0, %v1447
  %1449 = vmatmul.bf16.gmra.mxu0 %v835
  %v1450 = vpop.f32.mrf.mxu0
  %v1451 = vadd.f32 0.0, %v1450
  %v1452 = vpop.f32.mrf.mxu0
  %v1453 = vadd.f32 0.0, %v1452
  %1454 = vmatmul.bf16.gmra.mxu0 %v836
  %v1455 = vpop.f32.mrf.mxu0
  %v1456 = vadd.f32 0.0, %v1455
  %v1457 = vpop.f32.mrf.mxu0
  %v1458 = vadd.f32 0.0, %v1457
  %1459 = vmatmul.bf16.gmra.mxu0 %v837
  %v1460 = vpop.f32.mrf.mxu0
  %v1461 = vadd.f32 0.0, %v1460
  %v1462 = vpop.f32.mrf.mxu0
  %v1463 = vadd.f32 0.0, %v1462
  %1464 = vmatmul.bf16.gmra.mxu0 %v838
  %v1465 = vpop.f32.mrf.mxu0
  %v1466 = vadd.f32 0.0, %v1465
  %v1467 = vpop.f32.mrf.mxu0
  %v1468 = vadd.f32 0.0, %v1467
  %1469 = vmatmul.bf16.gmra.mxu0 %v839
  %v1470 = vpop.f32.mrf.mxu0
  %v1471 = vadd.f32 0.0, %v1470
  %v1472 = vpop.f32.mrf.mxu0
  %v1473 = vadd.f32 0.0, %v1472
  %1474 = vmatmul.bf16.gmra.mxu0 %v840
  %v1475 = vpop.f32.mrf.mxu0
  %v1476 = vadd.f32 0.0, %v1475
  %v1477 = vpop.f32.mrf.mxu0
  %v1478 = vadd.f32 0.0, %v1477
  %1479 = vmatmul.bf16.gmra.mxu0 %v841
  %v1480 = vpop.f32.mrf.mxu0
  %v1481 = vadd.f32 0.0, %v1480
  %v1482 = vpop.f32.mrf.mxu0
  %v1483 = vadd.f32 0.0, %v1482
  %1484 = vmatmul.bf16.gmra.mxu0 %v842
  %v1485 = vpop.f32.mrf.mxu0
  %v1486 = vadd.f32 0.0, %v1485
  %v1487 = vpop.f32.mrf.mxu0
  %v1488 = vadd.f32 0.0, %v1487
  %1489 = vmatmul.bf16.gmra.mxu0 %v843
  %v1490 = vpop.f32.mrf.mxu0
  %v1491 = vadd.f32 0.0, %v1490
  %v1492 = vpop.f32.mrf.mxu0
  %v1493 = vadd.f32 0.0, %v1492
  %1494 = vmatmul.bf16.gmra.mxu0 %v844
  %v1495 = vpop.f32.mrf.mxu0
  %v1496 = vadd.f32 0.0, %v1495
  %v1497 = vpop.f32.mrf.mxu0
  %v1498 = vadd.f32 0.0, %v1497
  %1499 = vmatmul.bf16.gmra.mxu0 %v845
  %v1500 = vpop.f32.mrf.mxu0
  %v1501 = vadd.f32 0.0, %v1500
  %v1502 = vpop.f32.mrf.mxu0
  %v1503 = vadd.f32 0.0, %v1502
  %1504 = vmatmul.bf16.gmra.mxu0 %v846
  %v1505 = vpop.f32.mrf.mxu0
  %v1506 = vadd.f32 0.0, %v1505
  %v1507 = vpop.f32.mrf.mxu0
  %v1508 = vadd.f32 0.0, %v1507
  %1509 = vmatmul.bf16.gmra.mxu0 %v847
  %v1510 = vpop.f32.mrf.mxu0
  %v1511 = vadd.f32 0.0, %v1510
  %v1512 = vpop.f32.mrf.mxu0
  %v1513 = vadd.f32 0.0, %v1512
  %1514 = vmatmul.bf16.gmra.mxu0 %v848
  %v1515 = vpop.f32.mrf.mxu0
  %v1516 = vadd.f32 0.0, %v1515
  %v1517 = vpop.f32.mrf.mxu0
  %v1518 = vadd.f32 0.0, %v1517
  %1519 = vmatmul.bf16.gmra.mxu0 %v849
  %v1520 = vpop.f32.mrf.mxu0
  %v1521 = vadd.f32 0.0, %v1520
  %v1522 = vpop.f32.mrf.mxu0
  %v1523 = vadd.f32 0.0, %v1522
  %1524 = vmatmul.bf16.gmra.mxu0 %v850
  %v1525 = vpop.f32.mrf.mxu0
  %v1526 = vadd.f32 0.0, %v1525
  %v1527 = vpop.f32.mrf.mxu0
  %v1528 = vadd.f32 0.0, %v1527
  %1529 = vmatmul.bf16.gmra.mxu0 %v851
  %v1530 = vpop.f32.mrf.mxu0
  %v1531 = vadd.f32 0.0, %v1530
  %v1532 = vpop.f32.mrf.mxu0
  %v1533 = vadd.f32 0.0, %v1532
  %1534 = vmatmul.bf16.gmra.mxu0 %v852
  %v1535 = vpop.f32.mrf.mxu0
  %v1536 = vadd.f32 0.0, %v1535
  %v1537 = vpop.f32.mrf.mxu0
  %v1538 = vadd.f32 0.0, %v1537
  %1539 = vmatmul.bf16.gmra.mxu0 %v853
  %v1540 = vpop.f32.mrf.mxu0
  %v1541 = vadd.f32 0.0, %v1540
  %v1542 = vpop.f32.mrf.mxu0
  %v1543 = vadd.f32 0.0, %v1542
  %1544 = vmatmul.bf16.gmra.mxu0 %v854
  %v1545 = vpop.f32.mrf.mxu0
  %v1546 = vadd.f32 0.0, %v1545
  %v1547 = vpop.f32.mrf.mxu0
  %v1548 = vadd.f32 0.0, %v1547
  %1549 = vmatmul.bf16.gmra.mxu0 %v855
  %v1550 = vpop.f32.mrf.mxu0
  %v1551 = vadd.f32 0.0, %v1550
  %v1552 = vpop.f32.mrf.mxu0
  %v1553 = vadd.f32 0.0, %v1552
  %1554 = vmatmul.bf16.gmra.mxu0 %v856
  %v1555 = vpop.f32.mrf.mxu0
  %v1556 = vadd.f32 0.0, %v1555
  %v1557 = vpop.f32.mrf.mxu0
  %v1558 = vadd.f32 0.0, %v1557
  %1559 = vmatmul.bf16.gmra.mxu0 %v857
  %v1560 = vpop.f32.mrf.mxu0
  %v1561 = vadd.f32 0.0, %v1560
  %v1562 = vpop.f32.mrf.mxu0
  %v1563 = vadd.f32 0.0, %v1562
  %1564 = vmatmul.bf16.gmra.mxu0 %v858
  %v1565 = vpop.f32.mrf.mxu0
  %v1566 = vadd.f32 0.0, %v1565
  %v1567 = vpop.f32.mrf.mxu0
  %v1568 = vadd.f32 0.0, %v1567
  %1569 = vmatmul.bf16.gmra.mxu0 %v859
  %v1570 = vpop.f32.mrf.mxu0
  %v1571 = vadd.f32 0.0, %v1570
  %v1572 = vpop.f32.mrf.mxu0
  %v1573 = vadd.f32 0.0, %v1572
  %1574 = vmatmul.bf16.gmra.mxu0 %v860
  %v1575 = vpop.f32.mrf.mxu0
  %v1576 = vadd.f32 0.0, %v1575
  %v1577 = vpop.f32.mrf.mxu0
  %v1578 = vadd.f32 0.0, %v1577
  %1579 = vmatmul.bf16.gmra.mxu0 %v861
  %v1580 = vpop.f32.mrf.mxu0
  %v1581 = vadd.f32 0.0, %v1580
  %v1582 = vpop.f32.mrf.mxu0
  %v1583 = vadd.f32 0.0, %v1582
  %1584 = vmatmul.bf16.gmra.mxu0 %v862
  %v1585 = vpop.f32.mrf.mxu0
  %v1586 = vadd.f32 0.0, %v1585
  %v1587 = vpop.f32.mrf.mxu0
  %v1588 = vadd.f32 0.0, %v1587
  %1589 = vmatmul.bf16.gmra.mxu0 %v863
  %v1590 = vpop.f32.mrf.mxu0
  %v1591 = vadd.f32 0.0, %v1590
  %v1592 = vpop.f32.mrf.mxu0
  %v1593 = vadd.f32 0.0, %v1592
  %1594 = vmatmul.bf16.gmra.mxu0 %v864
  %v1595 = vpop.f32.mrf.mxu0
  %v1596 = vadd.f32 0.0, %v1595
  %v1597 = vpop.f32.mrf.mxu0
  %v1598 = vadd.f32 0.0, %v1597
  %1599 = vmatmul.bf16.gmra.mxu0 %v865
  %v1600 = vpop.f32.mrf.mxu0
  %v1601 = vadd.f32 0.0, %v1600
  %v1602 = vpop.f32.mrf.mxu0
  %v1603 = vadd.f32 0.0, %v1602
  %1604 = vmatmul.bf16.gmra.mxu0 %v866
  %v1605 = vpop.f32.mrf.mxu0
  %v1606 = vadd.f32 0.0, %v1605
  %v1607 = vpop.f32.mrf.mxu0
  %v1608 = vadd.f32 0.0, %v1607
  %1609 = vmatmul.bf16.gmra.mxu0 %v867
  %v1610 = vpop.f32.mrf.mxu0
  %v1611 = vadd.f32 0.0, %v1610
  %v1612 = vpop.f32.mrf.mxu0
  %v1613 = vadd.f32 0.0, %v1612
  %1614 = vmatmul.bf16.gmra.mxu0 %v868
  %v1615 = vpop.f32.mrf.mxu0
  %v1616 = vadd.f32 0.0, %v1615
  %v1617 = vpop.f32.mrf.mxu0
  %v1618 = vadd.f32 0.0, %v1617
  %1619 = vmatmul.bf16.gmra.mxu0 %v869
  %v1620 = vpop.f32.mrf.mxu0
  %v1621 = vadd.f32 0.0, %v1620
  %v1622 = vpop.f32.mrf.mxu0
  %v1623 = vadd.f32 0.0, %v1622
  %1624 = vmatmul.bf16.gmra.mxu0 %v870
  %v1625 = vpop.f32.mrf.mxu0
  %v1626 = vadd.f32 0.0, %v1625
  %v1627 = vpop.f32.mrf.mxu0
  %v1628 = vadd.f32 0.0, %v1627
  %1629 = vmatmul.bf16.gmra.mxu0 %v871
  %v1630 = vpop.f32.mrf.mxu0
  %v1631 = vadd.f32 0.0, %v1630
  %v1632 = vpop.f32.mrf.mxu0
  %v1633 = vadd.f32 0.0, %v1632
  %1634 = vmatmul.bf16.gmra.mxu0 %v872
  %v1635 = vpop.f32.mrf.mxu0
  %v1636 = vadd.f32 0.0, %v1635
  %v1637 = vpop.f32.mrf.mxu0
  %v1638 = vadd.f32 0.0, %v1637
  %1639 = vmatmul.bf16.gmra.mxu0 %v873
  %v1640 = vpop.f32.mrf.mxu0
  %v1641 = vadd.f32 0.0, %v1640
  %v1642 = vpop.f32.mrf.mxu0
  %v1643 = vadd.f32 0.0, %v1642
  %1644 = vmatmul.bf16.gmra.mxu0 %v874
  %v1645 = vpop.f32.mrf.mxu0
  %v1646 = vadd.f32 0.0, %v1645
  %v1647 = vpop.f32.mrf.mxu0
  %v1648 = vadd.f32 0.0, %v1647
  %1649 = vmatmul.bf16.gmra.mxu0 %v875
  %v1650 = vpop.f32.mrf.mxu0
  %v1651 = vadd.f32 0.0, %v1650
  %v1652 = vpop.f32.mrf.mxu0
  %v1653 = vadd.f32 0.0, %v1652
  %1654 = vmatmul.bf16.gmra.mxu0 %v876
  %v1655 = vpop.f32.mrf.mxu0
  %v1656 = vadd.f32 0.0, %v1655
  %v1657 = vpop.f32.mrf.mxu0
  %1658 = vdwg.mxu0
  %v1659 = vadd.f32 %v1056, %v1058
  %v1660 = vadd.f32 %v1659, %v1061
  %v1661 = vadd.f32 %v1660, %v1063
  %v1662 = vadd.f32 %v1661, %v1066
  %v1663 = vadd.f32 %v1662, %v1068
  %v1664 = vadd.f32 %v1663, %v1071
  %v1665 = vadd.f32 %v1664, %v1073
  %v1666 = vadd.f32 %v1665, %v1076
  %v1667 = vadd.f32 %v1666, %v1078
  %v1668 = vadd.f32 %v1667, %v1081
  %v1669 = vadd.f32 %v1668, %v1083
  %v1670 = vadd.f32 %v1669, %v1086
  %v1671 = vadd.f32 %v1670, %v1088
  %v1672 = vadd.f32 %v1671, %v1091
  %v1673 = vadd.f32 %v1672, %v1093
  %v1674 = vadd.f32 %v1673, %v1096
  %v1675 = vadd.f32 %v1674, %v1098
  %v1676 = vadd.f32 %v1675, %v1101
  %v1677 = vadd.f32 %v1676, %v1103
  %v1678 = vadd.f32 %v1677, %v1106
  %v1679 = vadd.f32 %v1678, %v1108
  %v1680 = vadd.f32 %v1679, %v1111
  %v1681 = vadd.f32 %v1680, %v1113
  %v1682 = vadd.f32 %v1681, %v1116
  %v1683 = vadd.f32 %v1682, %v1118
  %v1684 = vadd.f32 %v1683, %v1121
  %v1685 = vadd.f32 %v1684, %v1123
  %v1686 = vadd.f32 %v1685, %v1126
  %v1687 = vadd.f32 %v1686, %v1128
  %v1688 = vadd.f32 %v1687, %v1131
  %v1689 = vadd.f32 %v1688, %v1133
  %v1690 = vadd.f32 %v1689, %v1136
  %v1691 = vadd.f32 %v1690, %v1138
  %v1692 = vadd.f32 %v1691, %v1141
  %v1693 = vadd.f32 %v1692, %v1143
  %v1694 = vadd.f32 %v1693, %v1146
  %v1695 = vadd.f32 %v1694, %v1148
  %v1696 = vadd.f32 %v1695, %v1151
  %v1697 = vadd.f32 %v1696, %v1153
  %v1698 = vadd.f32 %v1697, %v1156
  %v1699 = vadd.f32 %v1698, %v1158
  %v1700 = vadd.f32 %v1699, %v1161
  %v1701 = vadd.f32 %v1700, %v1163
  %v1702 = vadd.f32 %v1701, %v1166
  %v1703 = vadd.f32 %v1702, %v1168
  %v1704 = vadd.f32 %v1703, %v1171
  %v1705 = vadd.f32 %v1704, %v1173
  %v1706 = vadd.f32 %v1705, %v1176
  %v1707 = vadd.f32 %v1706, %v1178
  %v1708 = vadd.f32 %v1707, %v1181
  %v1709 = vadd.f32 %v1708, %v1183
  %v1710 = vadd.f32 %v1709, %v1186
  %v1711 = vadd.f32 %v1710, %v1188
  %v1712 = vadd.f32 %v1711, %v1191
  %v1713 = vadd.f32 %v1712, %v1193
  %v1714 = vadd.f32 %v1713, %v1196
  %v1715 = vadd.f32 %v1714, %v1198
  %v1716 = vadd.f32 %v1715, %v1201
  %v1717 = vadd.f32 %v1716, %v1203
  %v1718 = vadd.f32 %v1717, %v1206
  %v1719 = vadd.f32 %v1718, %v1208
  %v1720 = vadd.f32 %v1719, %v1211
  %v1721 = vadd.f32 %v1720, %v1213
  %v1722 = vadd.f32 %v1721, %v1216
  %v1723 = vadd.f32 %v1722, %v1218
  %v1724 = vadd.f32 %v1723, %v1221
  %v1725 = vadd.f32 %v1724, %v1223
  %v1726 = vadd.f32 %v1725, %v1226
  %v1727 = vadd.f32 %v1726, %v1228
  %v1728 = vadd.f32 %v1727, %v1231
  %v1729 = vadd.f32 %v1728, %v1233
  %v1730 = vadd.f32 %v1729, %v1236
  %v1731 = vadd.f32 %v1730, %v1238
  %v1732 = vadd.f32 %v1731, %v1241
  %v1733 = vadd.f32 %v1732, %v1243
  %v1734 = vadd.f32 %v1733, %v1246
  %v1735 = vadd.f32 %v1734, %v1248
  %v1736 = vadd.f32 %v1735, %v1251
  %v1737 = vadd.f32 %v1736, %v1253
  %v1738 = vadd.f32 %v1737, %v1256
  %v1739 = vadd.f32 %v1738, %v1258
  %v1740 = vadd.f32 %v1739, %v1261
  %v1741 = vadd.f32 %v1740, %v1263
  %v1742 = vadd.f32 %v1741, %v1266
  %v1743 = vadd.f32 %v1742, %v1268
  %v1744 = vadd.f32 %v1743, %v1271
  %v1745 = vadd.f32 %v1744, %v1273
  %v1746 = vadd.f32 %v1745, %v1276
  %v1747 = vadd.f32 %v1746, %v1278
  %v1748 = vadd.f32 %v1747, %v1281
  %v1749 = vadd.f32 %v1748, %v1283
  %v1750 = vadd.f32 %v1749, %v1286
  %v1751 = vadd.f32 %v1750, %v1288
  %v1752 = vadd.f32 %v1751, %v1291
  %v1753 = vadd.f32 %v1752, %v1293
  %v1754 = vadd.f32 %v1753, %v1296
  %v1755 = vadd.f32 %v1754, %v1298
  %v1756 = vadd.f32 %v1755, %v1301
  %v1757 = vadd.f32 %v1756, %v1303
  %v1758 = vadd.f32 %v1757, %v1306
  %v1759 = vadd.f32 %v1758, %v1308
  %v1760 = vadd.f32 %v1759, %v1311
  %v1761 = vadd.f32 %v1760, %v1313
  %v1762 = vadd.f32 %v1761, %v1316
  %v1763 = vadd.f32 %v1762, %v1318
  %v1764 = vadd.f32 %v1763, %v1321
  %v1765 = vadd.f32 %v1764, %v1323
  %v1766 = vadd.f32 %v1765, %v1326
  %v1767 = vadd.f32 %v1766, %v1328
  %v1768 = vadd.f32 %v1767, %v1331
  %v1769 = vadd.f32 %v1768, %v1333
  %v1770 = vadd.f32 %v1769, %v1336
  %v1771 = vadd.f32 %v1770, %v1338
  %v1772 = vadd.f32 %v1771, %v1341
  %v1773 = vadd.f32 %v1772, %v1343
  %v1774 = vadd.f32 %v1773, %v1346
  %v1775 = vadd.f32 %v1774, %v1348
  %v1776 = vadd.f32 %v1775, %v1351
  %v1777 = vadd.f32 %v1776, %v1353
  %v1778 = vadd.f32 %v1777, %v1356
  %v1779 = vadd.f32 %v1778, %v1358
  %v1780 = vadd.f32 %v1779, %v1361
  %v1781 = vadd.f32 %v1780, %v1363
  %v1782 = vadd.f32 %v1781, %v1366
  %v1783 = vadd.f32 %v1782, %v1368
  %v1784 = vadd.f32 %v1783, %v1371
  %v1785 = vadd.f32 %v1784, %v1373
  %v1786 = vadd.f32 %v1785, %v1376
  %v1787 = vadd.f32 %v1786, %v1378
  %v1788 = vadd.f32 %v1787, %v1381
  %v1789 = vadd.f32 %v1788, %v1383
  %v1790 = vadd.f32 %v1789, %v1386
  %v1791 = vadd.f32 %v1790, %v1388
  %v1792 = vadd.f32 %v1791, %v1391
  %v1793 = vadd.f32 %v1792, %v1393
  %v1794 = vadd.f32 %v1793, %v1396
  %v1795 = vadd.f32 %v1794, %v1398
  %v1796 = vadd.f32 %v1795, %v1401
  %v1797 = vadd.f32 %v1796, %v1403
  %v1798 = vadd.f32 %v1797, %v1406
  %v1799 = vadd.f32 %v1798, %v1408
  %v1800 = vadd.f32 %v1799, %v1411
  %v1801 = vadd.f32 %v1800, %v1413
  %v1802 = vadd.f32 %v1801, %v1416
  %v1803 = vadd.f32 %v1802, %v1418
  %v1804 = vadd.f32 %v1803, %v1421
  %v1805 = vadd.f32 %v1804, %v1423
  %v1806 = vadd.f32 %v1805, %v1426
  %v1807 = vadd.f32 %v1806, %v1428
  %v1808 = vadd.f32 %v1807, %v1431
  %v1809 = vadd.f32 %v1808, %v1433
  %v1810 = vadd.f32 %v1809, %v1436
  %v1811 = vadd.f32 %v1810, %v1438
  %v1812 = vadd.f32 %v1811, %v1441
  %v1813 = vadd.f32 %v1812, %v1443
  %v1814 = vadd.f32 %v1813, %v1446
  %v1815 = vadd.f32 %v1814, %v1448
  %v1816 = vadd.f32 %v1815, %v1451
  %v1817 = vadd.f32 %v1816, %v1453
  %v1818 = vadd.f32 %v1817, %v1456
  %v1819 = vadd.f32 %v1818, %v1458
  %v1820 = vadd.f32 %v1819, %v1461
  %v1821 = vadd.f32 %v1820, %v1463
  %v1822 = vadd.f32 %v1821, %v1466
  %v1823 = vadd.f32 %v1822, %v1468
  %v1824 = vadd.f32 %v1823, %v1471
  %v1825 = vadd.f32 %v1824, %v1473
  %v1826 = vadd.f32 %v1825, %v1476
  %v1827 = vadd.f32 %v1826, %v1478
  %v1828 = vadd.f32 %v1827, %v1481
  %v1829 = vadd.f32 %v1828, %v1483
  %v1830 = vadd.f32 %v1829, %v1486
  %v1831 = vadd.f32 %v1830, %v1488
  %v1832 = vadd.f32 %v1831, %v1491
  %v1833 = vadd.f32 %v1832, %v1493
  %v1834 = vadd.f32 %v1833, %v1496
  %v1835 = vadd.f32 %v1834, %v1498
  %v1836 = vadd.f32 %v1835, %v1501
  %v1837 = vadd.f32 %v1836, %v1503
  %v1838 = vadd.f32 %v1837, %v1506
  %v1839 = vadd.f32 %v1838, %v1508
  %v1840 = vadd.f32 %v1839, %v1511
  %v1841 = vadd.f32 %v1840, %v1513
  %v1842 = vadd.f32 %v1841, %v1516
  %v1843 = vadd.f32 %v1842, %v1518
  %v1844 = vadd.f32 %v1843, %v1521
  %v1845 = vadd.f32 %v1844, %v1523
  %v1846 = vadd.f32 %v1845, %v1526
  %v1847 = vadd.f32 %v1846, %v1528
  %v1848 = vadd.f32 %v1847, %v1531
  %v1849 = vadd.f32 %v1848, %v1533
  %v1850 = vadd.f32 %v1849, %v1536
  %v1851 = vadd.f32 %v1850, %v1538
  %v1852 = vadd.f32 %v1851, %v1541
  %v1853 = vadd.f32 %v1852, %v1543
  %v1854 = vadd.f32 %v1853, %v1546
  %v1855 = vadd.f32 %v1854, %v1548
  %v1856 = vadd.f32 %v1855, %v1551
  %v1857 = vadd.f32 %v1856, %v1553
  %v1858 = vadd.f32 %v1857, %v1556
  %v1859 = vadd.f32 %v1858, %v1558
  %v1860 = vadd.f32 %v1859, %v1561
  %v1861 = vadd.f32 %v1860, %v1563
  %v1862 = vadd.f32 %v1861, %v1566
  %v1863 = vadd.f32 %v1862, %v1568
  %v1864 = vadd.f32 %v1863, %v1571
  %v1865 = vadd.f32 %v1864, %v1573
  %v1866 = vadd.f32 %v1865, %v1576
  %v1867 = vadd.f32 %v1866, %v1578
  %v1868 = vadd.f32 %v1867, %v1581
  %v1869 = vadd.f32 %v1868, %v1583
  %v1870 = vadd.f32 %v1869, %v1586
  %v1871 = vadd.f32 %v1870, %v1588
  %v1872 = vadd.f32 %v1871, %v1591
  %v1873 = vadd.f32 %v1872, %v1593
  %v1874 = vadd.f32 %v1873, %v1596
  %v1875 = vadd.f32 %v1874, %v1598
  %v1876 = vadd.f32 %v1875, %v1601
  %v1877 = vadd.f32 %v1876, %v1603
  %v1878 = vadd.f32 %v1877, %v1606
  %v1879 = vadd.f32 %v1878, %v1608
  %v1880 = vadd.f32 %v1879, %v1611
  %v1881 = vadd.f32 %v1880, %v1613
  %v1882 = vadd.f32 %v1881, %v1616
  %v1883 = vadd.f32 %v1882, %v1618
  %v1884 = vadd.f32 %v1883, %v1621
  %v1885 = vadd.f32 %v1884, %v1623
  %v1886 = vadd.f32 %v1885, %v1626
  %v1887 = vadd.f32 %v1886, %v1628
  %v1888 = vadd.f32 %v1887, %v1631
  %v1889 = vadd.f32 %v1888, %v1633
  %v1890 = vadd.f32 %v1889, %v1636
  %v1891 = vadd.f32 %v1890, %v1638
  %v1892 = vadd.f32 %v1891, %v1641
  %v1893 = vadd.f32 %v1892, %v1643
  %v1894 = vadd.f32 %v1893, %v1646
  %v1895 = vadd.f32 %v1894, %v1648
  %v1896 = vadd.f32 %v1895, %v1651
  %v1897 = vadd.f32 %v1896, %v1653
  %v1898 = vadd.f32 %v1897, %v1656
  %v1899 = vrot.slane %v1898, 4
  %v1900 = vadd.f32 %v1898, %v1899
  %v1901 = vrot.slane %v1900, 2
  %v1902 = vadd.f32 %v1900, %v1901
  %v1903 = vrot.slane %v1902, 1
  %v1904 = vadd.f32 %v1902, %v1903
  %v1905 = vmul.f32 %v1056, %v1056
  %v1906 = vmul.f32 %v1058, %v1058
  %v1907 = vmul.f32 %v1061, %v1061
  %v1908 = vmul.f32 %v1063, %v1063
  %v1909 = vmul.f32 %v1066, %v1066
  %v1910 = vmul.f32 %v1068, %v1068
  %v1911 = vmul.f32 %v1071, %v1071
  %v1912 = vmul.f32 %v1073, %v1073
  %v1913 = vmul.f32 %v1076, %v1076
  %v1914 = vmul.f32 %v1078, %v1078
  %v1915 = vmul.f32 %v1081, %v1081
  %v1916 = vmul.f32 %v1083, %v1083
  %v1917 = vmul.f32 %v1086, %v1086
  %v1918 = vmul.f32 %v1088, %v1088
  %v1919 = vmul.f32 %v1091, %v1091
  %v1920 = vmul.f32 %v1093, %v1093
  %v1921 = vmul.f32 %v1096, %v1096
  %v1922 = vmul.f32 %v1098, %v1098
  %v1923 = vmul.f32 %v1101, %v1101
  %v1924 = vmul.f32 %v1103, %v1103
  %v1925 = vmul.f32 %v1106, %v1106
  %v1926 = vmul.f32 %v1108, %v1108
  %v1927 = vmul.f32 %v1111, %v1111
  %v1928 = vmul.f32 %v1113, %v1113
  %v1929 = vmul.f32 %v1116, %v1116
  %v1930 = vmul.f32 %v1118, %v1118
  %v1931 = vmul.f32 %v1121, %v1121
  %v1932 = vmul.f32 %v1123, %v1123
  %v1933 = vmul.f32 %v1126, %v1126
  %v1934 = vmul.f32 %v1128, %v1128
  %v1935 = vmul.f32 %v1131, %v1131
  %v1936 = vmul.f32 %v1133, %v1133
  %v1937 = vmul.f32 %v1136, %v1136
  %v1938 = vmul.f32 %v1138, %v1138
  %v1939 = vmul.f32 %v1141, %v1141
  %v1940 = vmul.f32 %v1143, %v1143
  %v1941 = vmul.f32 %v1146, %v1146
  %v1942 = vmul.f32 %v1148, %v1148
  %v1943 = vmul.f32 %v1151, %v1151
  %v1944 = vmul.f32 %v1153, %v1153
  %v1945 = vmul.f32 %v1156, %v1156
  %v1946 = vmul.f32 %v1158, %v1158
  %v1947 = vmul.f32 %v1161, %v1161
  %v1948 = vmul.f32 %v1163, %v1163
  %v1949 = vmul.f32 %v1166, %v1166
  %v1950 = vmul.f32 %v1168, %v1168
  %v1951 = vmul.f32 %v1171, %v1171
  %v1952 = vmul.f32 %v1173, %v1173
  %v1953 = vmul.f32 %v1176, %v1176
  %v1954 = vmul.f32 %v1178, %v1178
  %v1955 = vmul.f32 %v1181, %v1181
  %v1956 = vmul.f32 %v1183, %v1183
  %v1957 = vmul.f32 %v1186, %v1186
  %v1958 = vmul.f32 %v1188, %v1188
  %v1959 = vmul.f32 %v1191, %v1191
  %v1960 = vmul.f32 %v1193, %v1193
  %v1961 = vmul.f32 %v1196, %v1196
  %v1962 = vmul.f32 %v1198, %v1198
  %v1963 = vmul.f32 %v1201, %v1201
  %v1964 = vmul.f32 %v1203, %v1203
  %v1965 = vmul.f32 %v1206, %v1206
  %v1966 = vmul.f32 %v1208, %v1208
  %v1967 = vmul.f32 %v1211, %v1211
  %v1968 = vmul.f32 %v1213, %v1213
  %v1969 = vmul.f32 %v1216, %v1216
  %v1970 = vmul.f32 %v1218, %v1218
  %v1971 = vmul.f32 %v1221, %v1221
  %v1972 = vmul.f32 %v1223, %v1223
  %v1973 = vmul.f32 %v1226, %v1226
  %v1974 = vmul.f32 %v1228, %v1228
  %v1975 = vmul.f32 %v1231, %v1231
  %v1976 = vmul.f32 %v1233, %v1233
  %v1977 = vmul.f32 %v1236, %v1236
  %v1978 = vmul.f32 %v1238, %v1238
  %v1979 = vmul.f32 %v1241, %v1241
  %v1980 = vmul.f32 %v1243, %v1243
  %v1981 = vmul.f32 %v1246, %v1246
  %v1982 = vmul.f32 %v1248, %v1248
  %v1983 = vmul.f32 %v1251, %v1251
  %v1984 = vmul.f32 %v1253, %v1253
  %v1985 = vmul.f32 %v1256, %v1256
  %v1986 = vmul.f32 %v1258, %v1258
  %v1987 = vmul.f32 %v1261, %v1261
  %v1988 = vmul.f32 %v1263, %v1263
  %v1989 = vmul.f32 %v1266, %v1266
  %v1990 = vmul.f32 %v1268, %v1268
  %v1991 = vmul.f32 %v1271, %v1271
  %v1992 = vmul.f32 %v1273, %v1273
  %v1993 = vmul.f32 %v1276, %v1276
  %v1994 = vmul.f32 %v1278, %v1278
  %v1995 = vmul.f32 %v1281, %v1281
  %v1996 = vmul.f32 %v1283, %v1283
  %v1997 = vmul.f32 %v1286, %v1286
  %v1998 = vmul.f32 %v1288, %v1288
  %v1999 = vmul.f32 %v1291, %v1291
  %v2000 = vmul.f32 %v1293, %v1293
  %v2001 = vmul.f32 %v1296, %v1296
  %v2002 = vmul.f32 %v1298, %v1298
  %v2003 = vmul.f32 %v1301, %v1301
  %v2004 = vmul.f32 %v1303, %v1303
  %v2005 = vmul.f32 %v1306, %v1306
  %v2006 = vmul.f32 %v1308, %v1308
  %v2007 = vmul.f32 %v1311, %v1311
  %v2008 = vmul.f32 %v1313, %v1313
  %v2009 = vmul.f32 %v1316, %v1316
  %v2010 = vmul.f32 %v1318, %v1318
  %v2011 = vmul.f32 %v1321, %v1321
  %v2012 = vmul.f32 %v1323, %v1323
  %v2013 = vmul.f32 %v1326, %v1326
  %v2014 = vmul.f32 %v1328, %v1328
  %v2015 = vmul.f32 %v1331, %v1331
  %v2016 = vmul.f32 %v1333, %v1333
  %v2017 = vmul.f32 %v1336, %v1336
  %v2018 = vmul.f32 %v1338, %v1338
  %v2019 = vmul.f32 %v1341, %v1341
  %v2020 = vmul.f32 %v1343, %v1343
  %v2021 = vmul.f32 %v1346, %v1346
  %v2022 = vmul.f32 %v1348, %v1348
  %v2023 = vmul.f32 %v1351, %v1351
  %v2024 = vmul.f32 %v1353, %v1353
  %v2025 = vmul.f32 %v1356, %v1356
  %v2026 = vmul.f32 %v1358, %v1358
  %v2027 = vmul.f32 %v1361, %v1361
  %v2028 = vmul.f32 %v1363, %v1363
  %v2029 = vmul.f32 %v1366, %v1366
  %v2030 = vmul.f32 %v1368, %v1368
  %v2031 = vmul.f32 %v1371, %v1371
  %v2032 = vmul.f32 %v1373, %v1373
  %v2033 = vmul.f32 %v1376, %v1376
  %v2034 = vmul.f32 %v1378, %v1378
  %v2035 = vmul.f32 %v1381, %v1381
  %v2036 = vmul.f32 %v1383, %v1383
  %v2037 = vmul.f32 %v1386, %v1386
  %v2038 = vmul.f32 %v1388, %v1388
  %v2039 = vmul.f32 %v1391, %v1391
  %v2040 = vmul.f32 %v1393, %v1393
  %v2041 = vmul.f32 %v1396, %v1396
  %v2042 = vmul.f32 %v1398, %v1398
  %v2043 = vmul.f32 %v1401, %v1401
  %v2044 = vmul.f32 %v1403, %v1403
  %v2045 = vmul.f32 %v1406, %v1406
  %v2046 = vmul.f32 %v1408, %v1408
  %v2047 = vmul.f32 %v1411, %v1411
  %v2048 = vmul.f32 %v1413, %v1413
  %v2049 = vmul.f32 %v1416, %v1416
  %v2050 = vmul.f32 %v1418, %v1418
  %v2051 = vmul.f32 %v1421, %v1421
  %v2052 = vmul.f32 %v1423, %v1423
  %v2053 = vmul.f32 %v1426, %v1426
  %v2054 = vmul.f32 %v1428, %v1428
  %v2055 = vmul.f32 %v1431, %v1431
  %v2056 = vmul.f32 %v1433, %v1433
  %v2057 = vmul.f32 %v1436, %v1436
  %v2058 = vmul.f32 %v1438, %v1438
  %v2059 = vmul.f32 %v1441, %v1441
  %v2060 = vmul.f32 %v1443, %v1443
  %v2061 = vmul.f32 %v1446, %v1446
  %v2062 = vmul.f32 %v1448, %v1448
  %v2063 = vmul.f32 %v1451, %v1451
  %v2064 = vmul.f32 %v1453, %v1453
  %v2065 = vmul.f32 %v1456, %v1456
  %v2066 = vmul.f32 %v1458, %v1458
  %v2067 = vmul.f32 %v1461, %v1461
  %v2068 = vmul.f32 %v1463, %v1463
  %v2069 = vmul.f32 %v1466, %v1466
  %v2070 = vmul.f32 %v1468, %v1468
  %v2071 = vmul.f32 %v1471, %v1471
  %v2072 = vmul.f32 %v1473, %v1473
  %v2073 = vmul.f32 %v1476, %v1476
  %v2074 = vmul.f32 %v1478, %v1478
  %v2075 = vmul.f32 %v1481, %v1481
  %v2076 = vmul.f32 %v1483, %v1483
  %v2077 = vmul.f32 %v1486, %v1486
  %v2078 = vmul.f32 %v1488, %v1488
  %v2079 = vmul.f32 %v1491, %v1491
  %v2080 = vmul.f32 %v1493, %v1493
  %v2081 = vmul.f32 %v1496, %v1496
  %v2082 = vmul.f32 %v1498, %v1498
  %v2083 = vmul.f32 %v1501, %v1501
  %v2084 = vmul.f32 %v1503, %v1503
  %v2085 = vmul.f32 %v1506, %v1506
  %v2086 = vmul.f32 %v1508, %v1508
  %v2087 = vmul.f32 %v1511, %v1511
  %v2088 = vmul.f32 %v1513, %v1513
  %v2089 = vmul.f32 %v1516, %v1516
  %v2090 = vmul.f32 %v1518, %v1518
  %v2091 = vmul.f32 %v1521, %v1521
  %v2092 = vmul.f32 %v1523, %v1523
  %v2093 = vmul.f32 %v1526, %v1526
  %v2094 = vmul.f32 %v1528, %v1528
  %v2095 = vmul.f32 %v1531, %v1531
  %v2096 = vmul.f32 %v1533, %v1533
  %v2097 = vmul.f32 %v1536, %v1536
  %v2098 = vmul.f32 %v1538, %v1538
  %v2099 = vmul.f32 %v1541, %v1541
  %v2100 = vmul.f32 %v1543, %v1543
  %v2101 = vmul.f32 %v1546, %v1546
  %v2102 = vmul.f32 %v1548, %v1548
  %v2103 = vmul.f32 %v1551, %v1551
  %v2104 = vmul.f32 %v1553, %v1553
  %v2105 = vmul.f32 %v1556, %v1556
  %v2106 = vmul.f32 %v1558, %v1558
  %v2107 = vmul.f32 %v1561, %v1561
  %v2108 = vmul.f32 %v1563, %v1563
  %v2109 = vmul.f32 %v1566, %v1566
  %v2110 = vmul.f32 %v1568, %v1568
  %v2111 = vmul.f32 %v1571, %v1571
  %v2112 = vmul.f32 %v1573, %v1573
  %v2113 = vmul.f32 %v1576, %v1576
  %v2114 = vmul.f32 %v1578, %v1578
  %v2115 = vmul.f32 %v1581, %v1581
  %v2116 = vmul.f32 %v1583, %v1583
  %v2117 = vmul.f32 %v1586, %v1586
  %v2118 = vmul.f32 %v1588, %v1588
  %v2119 = vmul.f32 %v1591, %v1591
  %v2120 = vmul.f32 %v1593, %v1593
  %v2121 = vmul.f32 %v1596, %v1596
  %v2122 = vmul.f32 %v1598, %v1598
  %v2123 = vmul.f32 %v1601, %v1601
  %v2124 = vmul.f32 %v1603, %v1603
  %v2125 = vmul.f32 %v1606, %v1606
  %v2126 = vmul.f32 %v1608, %v1608
  %v2127 = vmul.f32 %v1611, %v1611
  %v2128 = vmul.f32 %v1613, %v1613
  %v2129 = vmul.f32 %v1616, %v1616
  %v2130 = vmul.f32 %v1618, %v1618
  %v2131 = vmul.f32 %v1621, %v1621
  %v2132 = vmul.f32 %v1623, %v1623
  %v2133 = vmul.f32 %v1626, %v1626
  %v2134 = vmul.f32 %v1628, %v1628
  %v2135 = vmul.f32 %v1631, %v1631
  %v2136 = vmul.f32 %v1633, %v1633
  %v2137 = vmul.f32 %v1636, %v1636
  %v2138 = vmul.f32 %v1638, %v1638
  %v2139 = vmul.f32 %v1641, %v1641
  %v2140 = vmul.f32 %v1643, %v1643
  %v2141 = vmul.f32 %v1646, %v1646
  %v2142 = vmul.f32 %v1648, %v1648
  %v2143 = vmul.f32 %v1651, %v1651
  %v2144 = vmul.f32 %v1653, %v1653
  %v2145 = vmul.f32 %v1656, %v1656
  %v2146 = vadd.f32 %v1905, %v1906
  %v2147 = vadd.f32 %v2146, %v1907
  %v2148 = vadd.f32 %v2147, %v1908
  %v2149 = vadd.f32 %v2148, %v1909
  %v2150 = vadd.f32 %v2149, %v1910
  %v2151 = vadd.f32 %v2150, %v1911
  %v2152 = vadd.f32 %v2151, %v1912
  %v2153 = vadd.f32 %v2152, %v1913
  %v2154 = vadd.f32 %v2153, %v1914
  %v2155 = vadd.f32 %v2154, %v1915
  %v2156 = vadd.f32 %v2155, %v1916
  %v2157 = vadd.f32 %v2156, %v1917
  %v2158 = vadd.f32 %v2157, %v1918
  %v2159 = vadd.f32 %v2158, %v1919
  %v2160 = vadd.f32 %v2159, %v1920
  %v2161 = vadd.f32 %v2160, %v1921
  %v2162 = vadd.f32 %v2161, %v1922
  %v2163 = vadd.f32 %v2162, %v1923
  %v2164 = vadd.f32 %v2163, %v1924
  %v2165 = vadd.f32 %v2164, %v1925
  %v2166 = vadd.f32 %v2165, %v1926
  %v2167 = vadd.f32 %v2166, %v1927
  %v2168 = vadd.f32 %v2167, %v1928
  %v2169 = vadd.f32 %v2168, %v1929
  %v2170 = vadd.f32 %v2169, %v1930
  %v2171 = vadd.f32 %v2170, %v1931
  %v2172 = vadd.f32 %v2171, %v1932
  %v2173 = vadd.f32 %v2172, %v1933
  %v2174 = vadd.f32 %v2173, %v1934
  %v2175 = vadd.f32 %v2174, %v1935
  %v2176 = vadd.f32 %v2175, %v1936
  %v2177 = vadd.f32 %v2176, %v1937
  %v2178 = vadd.f32 %v2177, %v1938
  %v2179 = vadd.f32 %v2178, %v1939
  %v2180 = vadd.f32 %v2179, %v1940
  %v2181 = vadd.f32 %v2180, %v1941
  %v2182 = vadd.f32 %v2181, %v1942
  %v2183 = vadd.f32 %v2182, %v1943
  %v2184 = vadd.f32 %v2183, %v1944
  %v2185 = vadd.f32 %v2184, %v1945
  %v2186 = vadd.f32 %v2185, %v1946
  %v2187 = vadd.f32 %v2186, %v1947
  %v2188 = vadd.f32 %v2187, %v1948
  %v2189 = vadd.f32 %v2188, %v1949
  %v2190 = vadd.f32 %v2189, %v1950
  %v2191 = vadd.f32 %v2190, %v1951
  %v2192 = vadd.f32 %v2191, %v1952
  %v2193 = vadd.f32 %v2192, %v1953
  %v2194 = vadd.f32 %v2193, %v1954
  %v2195 = vadd.f32 %v2194, %v1955
  %v2196 = vadd.f32 %v2195, %v1956
  %v2197 = vadd.f32 %v2196, %v1957
  %v2198 = vadd.f32 %v2197, %v1958
  %v2199 = vadd.f32 %v2198, %v1959
  %v2200 = vadd.f32 %v2199, %v1960
  %v2201 = vadd.f32 %v2200, %v1961
  %v2202 = vadd.f32 %v2201, %v1962
  %v2203 = vadd.f32 %v2202, %v1963
  %v2204 = vadd.f32 %v2203, %v1964
  %v2205 = vadd.f32 %v2204, %v1965
  %v2206 = vadd.f32 %v2205, %v1966
  %v2207 = vadd.f32 %v2206, %v1967
  %v2208 = vadd.f32 %v2207, %v1968
  %v2209 = vadd.f32 %v2208, %v1969
  %v2210 = vadd.f32 %v2209, %v1970
  %v2211 = vadd.f32 %v2210, %v1971
  %v2212 = vadd.f32 %v2211, %v1972
  %v2213 = vadd.f32 %v2212, %v1973
  %v2214 = vadd.f32 %v2213, %v1974
  %v2215 = vadd.f32 %v2214, %v1975
  %v2216 = vadd.f32 %v2215, %v1976
  %v2217 = vadd.f32 %v2216, %v1977
  %v2218 = vadd.f32 %v2217, %v1978
  %v2219 = vadd.f32 %v2218, %v1979
  %v2220 = vadd.f32 %v2219, %v1980
  %v2221 = vadd.f32 %v2220, %v1981
  %v2222 = vadd.f32 %v2221, %v1982
  %v2223 = vadd.f32 %v2222, %v1983
  %v2224 = vadd.f32 %v2223, %v1984
  %v2225 = vadd.f32 %v2224, %v1985
  %v2226 = vadd.f32 %v2225, %v1986
  %v2227 = vadd.f32 %v2226, %v1987
  %v2228 = vadd.f32 %v2227, %v1988
  %v2229 = vadd.f32 %v2228, %v1989
  %v2230 = vadd.f32 %v2229, %v1990
  %v2231 = vadd.f32 %v2230, %v1991
  %v2232 = vadd.f32 %v2231, %v1992
  %v2233 = vadd.f32 %v2232, %v1993
  %v2234 = vadd.f32 %v2233, %v1994
  %v2235 = vadd.f32 %v2234, %v1995
  %v2236 = vadd.f32 %v2235, %v1996
  %v2237 = vadd.f32 %v2236, %v1997
  %v2238 = vadd.f32 %v2237, %v1998
  %v2239 = vadd.f32 %v2238, %v1999
  %v2240 = vadd.f32 %v2239, %v2000
  %v2241 = vadd.f32 %v2240, %v2001
  %v2242 = vadd.f32 %v2241, %v2002
  %v2243 = vadd.f32 %v2242, %v2003
  %v2244 = vadd.f32 %v2243, %v2004
  %v2245 = vadd.f32 %v2244, %v2005
  %v2246 = vadd.f32 %v2245, %v2006
  %v2247 = vadd.f32 %v2246, %v2007
  %v2248 = vadd.f32 %v2247, %v2008
  %v2249 = vadd.f32 %v2248, %v2009
  %v2250 = vadd.f32 %v2249, %v2010
  %v2251 = vadd.f32 %v2250, %v2011
  %v2252 = vadd.f32 %v2251, %v2012
  %v2253 = vadd.f32 %v2252, %v2013
  %v2254 = vadd.f32 %v2253, %v2014
  %v2255 = vadd.f32 %v2254, %v2015
  %v2256 = vadd.f32 %v2255, %v2016
  %v2257 = vadd.f32 %v2256, %v2017
  %v2258 = vadd.f32 %v2257, %v2018
  %v2259 = vadd.f32 %v2258, %v2019
  %v2260 = vadd.f32 %v2259, %v2020
  %v2261 = vadd.f32 %v2260, %v2021
  %v2262 = vadd.f32 %v2261, %v2022
  %v2263 = vadd.f32 %v2262, %v2023
  %v2264 = vadd.f32 %v2263, %v2024
  %v2265 = vadd.f32 %v2264, %v2025
  %v2266 = vadd.f32 %v2265, %v2026
  %v2267 = vadd.f32 %v2266, %v2027
  %v2268 = vadd.f32 %v2267, %v2028
  %v2269 = vadd.f32 %v2268, %v2029
  %v2270 = vadd.f32 %v2269, %v2030
  %v2271 = vadd.f32 %v2270, %v2031
  %v2272 = vadd.f32 %v2271, %v2032
  %v2273 = vadd.f32 %v2272, %v2033
  %v2274 = vadd.f32 %v2273, %v2034
  %v2275 = vadd.f32 %v2274, %v2035
  %v2276 = vadd.f32 %v2275, %v2036
  %v2277 = vadd.f32 %v2276, %v2037
  %v2278 = vadd.f32 %v2277, %v2038
  %v2279 = vadd.f32 %v2278, %v2039
  %v2280 = vadd.f32 %v2279, %v2040
  %v2281 = vadd.f32 %v2280, %v2041
  %v2282 = vadd.f32 %v2281, %v2042
  %v2283 = vadd.f32 %v2282, %v2043
  %v2284 = vadd.f32 %v2283, %v2044
  %v2285 = vadd.f32 %v2284, %v2045
  %v2286 = vadd.f32 %v2285, %v2046
  %v2287 = vadd.f32 %v2286, %v2047
  %v2288 = vadd.f32 %v2287, %v2048
  %v2289 = vadd.f32 %v2288, %v2049
  %v2290 = vadd.f32 %v2289, %v2050
  %v2291 = vadd.f32 %v2290, %v2051
  %v2292 = vadd.f32 %v2291, %v2052
  %v2293 = vadd.f32 %v2292, %v2053
  %v2294 = vadd.f32 %v2293, %v2054
  %v2295 = vadd.f32 %v2294, %v2055
  %v2296 = vadd.f32 %v2295, %v2056
  %v2297 = vadd.f32 %v2296, %v2057
  %v2298 = vadd.f32 %v2297, %v2058
  %v2299 = vadd.f32 %v2298, %v2059
  %v2300 = vadd.f32 %v2299, %v2060
  %v2301 = vadd.f32 %v2300, %v2061
  %v2302 = vadd.f32 %v2301, %v2062
  %v2303 = vadd.f32 %v2302, %v2063
  %v2304 = vadd.f32 %v2303, %v2064
  %v2305 = vadd.f32 %v2304, %v2065
  %v2306 = vadd.f32 %v2305, %v2066
  %v2307 = vadd.f32 %v2306, %v2067
  %v2308 = vadd.f32 %v2307, %v2068
  %v2309 = vadd.f32 %v2308, %v2069
  %v2310 = vadd.f32 %v2309, %v2070
  %v2311 = vadd.f32 %v2310, %v2071
  %v2312 = vadd.f32 %v2311, %v2072
  %v2313 = vadd.f32 %v2312, %v2073
  %v2314 = vadd.f32 %v2313, %v2074
  %v2315 = vadd.f32 %v2314, %v2075
  %v2316 = vadd.f32 %v2315, %v2076
  %v2317 = vadd.f32 %v2316, %v2077
  %v2318 = vadd.f32 %v2317, %v2078
  %v2319 = vadd.f32 %v2318, %v2079
  %v2320 = vadd.f32 %v2319, %v2080
  %v2321 = vadd.f32 %v2320, %v2081
  %v2322 = vadd.f32 %v2321, %v2082
  %v2323 = vadd.f32 %v2322, %v2083
  %v2324 = vadd.f32 %v2323, %v2084
  %v2325 = vadd.f32 %v2324, %v2085
  %v2326 = vadd.f32 %v2325, %v2086
  %v2327 = vadd.f32 %v2326, %v2087
  %v2328 = vadd.f32 %v2327, %v2088
  %v2329 = vadd.f32 %v2328, %v2089
  %v2330 = vadd.f32 %v2329, %v2090
  %v2331 = vadd.f32 %v2330, %v2091
  %v2332 = vadd.f32 %v2331, %v2092
  %v2333 = vadd.f32 %v2332, %v2093
  %v2334 = vadd.f32 %v2333, %v2094
  %v2335 = vadd.f32 %v2334, %v2095
  %v2336 = vadd.f32 %v2335, %v2096
  %v2337 = vadd.f32 %v2336, %v2097
  %v2338 = vadd.f32 %v2337, %v2098
  %v2339 = vadd.f32 %v2338, %v2099
  %v2340 = vadd.f32 %v2339, %v2100
  %v2341 = vadd.f32 %v2340, %v2101
  %v2342 = vadd.f32 %v2341, %v2102
  %v2343 = vadd.f32 %v2342, %v2103
  %v2344 = vadd.f32 %v2343, %v2104
  %v2345 = vadd.f32 %v2344, %v2105
  %v2346 = vadd.f32 %v2345, %v2106
  %v2347 = vadd.f32 %v2346, %v2107
  %v2348 = vadd.f32 %v2347, %v2108
  %v2349 = vadd.f32 %v2348, %v2109
  %v2350 = vadd.f32 %v2349, %v2110
  %v2351 = vadd.f32 %v2350, %v2111
  %v2352 = vadd.f32 %v2351, %v2112
  %v2353 = vadd.f32 %v2352, %v2113
  %v2354 = vadd.f32 %v2353, %v2114
  %v2355 = vadd.f32 %v2354, %v2115
  %v2356 = vadd.f32 %v2355, %v2116
  %v2357 = vadd.f32 %v2356, %v2117
  %v2358 = vadd.f32 %v2357, %v2118
  %v2359 = vadd.f32 %v2358, %v2119
  %v2360 = vadd.f32 %v2359, %v2120
  %v2361 = vadd.f32 %v2360, %v2121
  %v2362 = vadd.f32 %v2361, %v2122
  %v2363 = vadd.f32 %v2362, %v2123
  %v2364 = vadd.f32 %v2363, %v2124
  %v2365 = vadd.f32 %v2364, %v2125
  %v2366 = vadd.f32 %v2365, %v2126
  %v2367 = vadd.f32 %v2366, %v2127
  %v2368 = vadd.f32 %v2367, %v2128
  %v2369 = vadd.f32 %v2368, %v2129
  %v2370 = vadd.f32 %v2369, %v2130
  %v2371 = vadd.f32 %v2370, %v2131
  %v2372 = vadd.f32 %v2371, %v2132
  %v2373 = vadd.f32 %v2372, %v2133
  %v2374 = vadd.f32 %v2373, %v2134
  %v2375 = vadd.f32 %v2374, %v2135
  %v2376 = vadd.f32 %v2375, %v2136
  %v2377 = vadd.f32 %v2376, %v2137
  %v2378 = vadd.f32 %v2377, %v2138
  %v2379 = vadd.f32 %v2378, %v2139
  %v2380 = vadd.f32 %v2379, %v2140
  %v2381 = vadd.f32 %v2380, %v2141
  %v2382 = vadd.f32 %v2381, %v2142
  %v2383 = vadd.f32 %v2382, %v2143
  %v2384 = vadd.f32 %v2383, %v2144
  %v2385 = vadd.f32 %v2384, %v2145
  %v2386 = vrot.slane %v2385, 4
  %v2387 = vadd.f32 %v2385, %v2386
  %v2388 = vrot.slane %v2387, 2
  %v2389 = vadd.f32 %v2387, %v2388
  %v2390 = vrot.slane %v2389, 1
  %v2391 = vadd.f32 %v2389, %v2390
  %v2392 = vmul.f32 %v1904, 0.0005202914
  %v2393 = vmul.f32 %v2391, 0.0005202914
  %v2394 = vmul.f32 %v2392, %v2392
  %v2395 = vsub.f32 %v2393, %v2394
  %v2396 = vadd.f32 %v2395, 1e-05
  %v2397 = vrsqrt.pop %v2396
  %v2398 = vmul.f32 %v2397, %v2396
  %v2399 = vmul.f32 %v2398, %v2397
  %v2400 = vmul.f32 0.5, %v2399
  %v2401 = vsub.f32 1.5, %v2400
  %v2402 = vmul.f32 %v2397, %v2401
  %vm2403 = vweird.f32 %v2396
  %vm2404 = vweird.f32 %v2397
  %vm2405 = vmor %vm2403, %vm2404
  %v2406 = vsel %vm2405, %v2397, %v2402
  %v2407 = vld [vmem:[%s2] sm:$0x1]
  %v2408 = vmul.f32 %v2406, %v2407
  %v2409 = vld [vmem:[%s3] sm:$0x1]
  %v2410 = vmul.f32 %v2392, %v2408
  %v2411 = vsub.f32 %v2409, %v2410
  %v2412 = vperm.slane %v2408, 0
  %v2413 = vmul.f32 %v1056, %v2412
  %v2414 = vmul.f32 %v1058, %v2412
  %v2415 = vmul.f32 %v1061, %v2412
  %v2416 = vmul.f32 %v1063, %v2412
  %v2417 = vmul.f32 %v1066, %v2412
  %v2418 = vmul.f32 %v1068, %v2412
  %v2419 = vmul.f32 %v1071, %v2412
  %v2420 = vmul.f32 %v1073, %v2412
  %v2421 = vmul.f32 %v1076, %v2412
  %v2422 = vmul.f32 %v1078, %v2412
  %v2423 = vmul.f32 %v1081, %v2412
  %v2424 = vmul.f32 %v1083, %v2412
  %v2425 = vmul.f32 %v1086, %v2412
  %v2426 = vmul.f32 %v1088, %v2412
  %v2427 = vmul.f32 %v1091, %v2412
  %v2428 = vmul.f32 %v1093, %v2412
  %v2429 = vmul.f32 %v1096, %v2412
  %v2430 = vmul.f32 %v1098, %v2412
  %v2431 = vmul.f32 %v1101, %v2412
  %v2432 = vmul.f32 %v1103, %v2412
  %v2433 = vmul.f32 %v1106, %v2412
  %v2434 = vmul.f32 %v1108, %v2412
  %v2435 = vmul.f32 %v1111, %v2412
  %v2436 = vmul.f32 %v1113, %v2412
  %v2437 = vmul.f32 %v1116, %v2412
  %v2438 = vmul.f32 %v1118, %v2412
  %v2439 = vmul.f32 %v1121, %v2412
  %v2440 = vmul.f32 %v1123, %v2412
  %v2441 = vmul.f32 %v1126, %v2412
  %v2442 = vmul.f32 %v1128, %v2412
  %v2443 = vmul.f32 %v1131, %v2412
  %v2444 = vmul.f32 %v1133, %v2412
  %v2445 = vmul.f32 %v1136, %v2412
  %v2446 = vmul.f32 %v1138, %v2412
  %v2447 = vmul.f32 %v1141, %v2412
  %v2448 = vmul.f32 %v1143, %v2412
  %v2449 = vmul.f32 %v1146, %v2412
  %v2450 = vmul.f32 %v1148, %v2412
  %v2451 = vmul.f32 %v1151, %v2412
  %v2452 = vmul.f32 %v1153, %v2412
  %v2453 = vmul.f32 %v1156, %v2412
  %v2454 = vmul.f32 %v1158, %v2412
  %v2455 = vmul.f32 %v1161, %v2412
  %v2456 = vmul.f32 %v1163, %v2412
  %v2457 = vmul.f32 %v1166, %v2412
  %v2458 = vmul.f32 %v1168, %v2412
  %v2459 = vmul.f32 %v1171, %v2412
  %v2460 = vmul.f32 %v1173, %v2412
  %v2461 = vmul.f32 %v1176, %v2412
  %v2462 = vmul.f32 %v1178, %v2412
  %v2463 = vmul.f32 %v1181, %v2412
  %v2464 = vmul.f32 %v1183, %v2412
  %v2465 = vmul.f32 %v1186, %v2412
  %v2466 = vmul.f32 %v1188, %v2412
  %v2467 = vmul.f32 %v1191, %v2412
  %v2468 = vmul.f32 %v1193, %v2412
  %v2469 = vmul.f32 %v1196, %v2412
  %v2470 = vmul.f32 %v1198, %v2412
  %v2471 = vmul.f32 %v1201, %v2412
  %v2472 = vmul.f32 %v1203, %v2412
  %v2473 = vmul.f32 %v1206, %v2412
  %v2474 = vmul.f32 %v1208, %v2412
  %v2475 = vmul.f32 %v1211, %v2412
  %v2476 = vmul.f32 %v1213, %v2412
  %v2477 = vmul.f32 %v1216, %v2412
  %v2478 = vmul.f32 %v1218, %v2412
  %v2479 = vmul.f32 %v1221, %v2412
  %v2480 = vmul.f32 %v1223, %v2412
  %v2481 = vmul.f32 %v1226, %v2412
  %v2482 = vmul.f32 %v1228, %v2412
  %v2483 = vmul.f32 %v1231, %v2412
  %v2484 = vmul.f32 %v1233, %v2412
  %v2485 = vmul.f32 %v1236, %v2412
  %v2486 = vmul.f32 %v1238, %v2412
  %v2487 = vmul.f32 %v1241, %v2412
  %v2488 = vmul.f32 %v1243, %v2412
  %v2489 = vmul.f32 %v1246, %v2412
  %v2490 = vmul.f32 %v1248, %v2412
  %v2491 = vmul.f32 %v1251, %v2412
  %v2492 = vmul.f32 %v1253, %v2412
  %v2493 = vmul.f32 %v1256, %v2412
  %v2494 = vmul.f32 %v1258, %v2412
  %v2495 = vmul.f32 %v1261, %v2412
  %v2496 = vmul.f32 %v1263, %v2412
  %v2497 = vmul.f32 %v1266, %v2412
  %v2498 = vmul.f32 %v1268, %v2412
  %v2499 = vmul.f32 %v1271, %v2412
  %v2500 = vmul.f32 %v1273, %v2412
  %v2501 = vmul.f32 %v1276, %v2412
  %v2502 = vmul.f32 %v1278, %v2412
  %v2503 = vmul.f32 %v1281, %v2412
  %v2504 = vmul.f32 %v1283, %v2412
  %v2505 = vmul.f32 %v1286, %v2412
  %v2506 = vmul.f32 %v1288, %v2412
  %v2507 = vmul.f32 %v1291, %v2412
  %v2508 = vmul.f32 %v1293, %v2412
  %v2509 = vmul.f32 %v1296, %v2412
  %v2510 = vmul.f32 %v1298, %v2412
  %v2511 = vmul.f32 %v1301, %v2412
  %v2512 = vmul.f32 %v1303, %v2412
  %v2513 = vmul.f32 %v1306, %v2412
  %v2514 = vmul.f32 %v1308, %v2412
  %v2515 = vmul.f32 %v1311, %v2412
  %v2516 = vmul.f32 %v1313, %v2412
  %v2517 = vmul.f32 %v1316, %v2412
  %v2518 = vmul.f32 %v1318, %v2412
  %v2519 = vmul.f32 %v1321, %v2412
  %v2520 = vmul.f32 %v1323, %v2412
  %v2521 = vmul.f32 %v1326, %v2412
  %v2522 = vmul.f32 %v1328, %v2412
  %v2523 = vmul.f32 %v1331, %v2412
  %v2524 = vmul.f32 %v1333, %v2412
  %v2525 = vmul.f32 %v1336, %v2412
  %v2526 = vmul.f32 %v1338, %v2412
  %v2527 = vmul.f32 %v1341, %v2412
  %v2528 = vmul.f32 %v1343, %v2412
  %v2529 = vmul.f32 %v1346, %v2412
  %v2530 = vmul.f32 %v1348, %v2412
  %v2531 = vmul.f32 %v1351, %v2412
  %v2532 = vmul.f32 %v1353, %v2412
  %v2533 = vmul.f32 %v1356, %v2412
  %v2534 = vmul.f32 %v1358, %v2412
  %v2535 = vmul.f32 %v1361, %v2412
  %v2536 = vmul.f32 %v1363, %v2412
  %v2537 = vmul.f32 %v1366, %v2412
  %v2538 = vmul.f32 %v1368, %v2412
  %v2539 = vmul.f32 %v1371, %v2412
  %v2540 = vmul.f32 %v1373, %v2412
  %v2541 = vmul.f32 %v1376, %v2412
  %v2542 = vmul.f32 %v1378, %v2412
  %v2543 = vmul.f32 %v1381, %v2412
  %v2544 = vmul.f32 %v1383, %v2412
  %v2545 = vmul.f32 %v1386, %v2412
  %v2546 = vmul.f32 %v1388, %v2412
  %v2547 = vmul.f32 %v1391, %v2412
  %v2548 = vmul.f32 %v1393, %v2412
  %v2549 = vmul.f32 %v1396, %v2412
  %v2550 = vmul.f32 %v1398, %v2412
  %v2551 = vmul.f32 %v1401, %v2412
  %v2552 = vmul.f32 %v1403, %v2412
  %v2553 = vmul.f32 %v1406, %v2412
  %v2554 = vmul.f32 %v1408, %v2412
  %v2555 = vmul.f32 %v1411, %v2412
  %v2556 = vmul.f32 %v1413, %v2412
  %v2557 = vmul.f32 %v1416, %v2412
  %v2558 = vmul.f32 %v1418, %v2412
  %v2559 = vmul.f32 %v1421, %v2412
  %v2560 = vmul.f32 %v1423, %v2412
  %v2561 = vmul.f32 %v1426, %v2412
  %v2562 = vmul.f32 %v1428, %v2412
  %v2563 = vmul.f32 %v1431, %v2412
  %v2564 = vmul.f32 %v1433, %v2412
  %v2565 = vmul.f32 %v1436, %v2412
  %v2566 = vmul.f32 %v1438, %v2412
  %v2567 = vmul.f32 %v1441, %v2412
  %v2568 = vmul.f32 %v1443, %v2412
  %v2569 = vmul.f32 %v1446, %v2412
  %v2570 = vmul.f32 %v1448, %v2412
  %v2571 = vmul.f32 %v1451, %v2412
  %v2572 = vmul.f32 %v1453, %v2412
  %v2573 = vmul.f32 %v1456, %v2412
  %v2574 = vmul.f32 %v1458, %v2412
  %v2575 = vmul.f32 %v1461, %v2412
  %v2576 = vmul.f32 %v1463, %v2412
  %v2577 = vmul.f32 %v1466, %v2412
  %v2578 = vmul.f32 %v1468, %v2412
  %v2579 = vmul.f32 %v1471, %v2412
  %v2580 = vmul.f32 %v1473, %v2412
  %v2581 = vmul.f32 %v1476, %v2412
  %v2582 = vmul.f32 %v1478, %v2412
  %v2583 = vmul.f32 %v1481, %v2412
  %v2584 = vmul.f32 %v1483, %v2412
  %v2585 = vmul.f32 %v1486, %v2412
  %v2586 = vmul.f32 %v1488, %v2412
  %v2587 = vmul.f32 %v1491, %v2412
  %v2588 = vmul.f32 %v1493, %v2412
  %v2589 = vmul.f32 %v1496, %v2412
  %v2590 = vmul.f32 %v1498, %v2412
  %v2591 = vmul.f32 %v1501, %v2412
  %v2592 = vmul.f32 %v1503, %v2412
  %v2593 = vmul.f32 %v1506, %v2412
  %v2594 = vmul.f32 %v1508, %v2412
  %v2595 = vmul.f32 %v1511, %v2412
  %v2596 = vmul.f32 %v1513, %v2412
  %v2597 = vmul.f32 %v1516, %v2412
  %v2598 = vmul.f32 %v1518, %v2412
  %v2599 = vmul.f32 %v1521, %v2412
  %v2600 = vmul.f32 %v1523, %v2412
  %v2601 = vmul.f32 %v1526, %v2412
  %v2602 = vmul.f32 %v1528, %v2412
  %v2603 = vmul.f32 %v1531, %v2412
  %v2604 = vmul.f32 %v1533, %v2412
  %v2605 = vmul.f32 %v1536, %v2412
  %v2606 = vmul.f32 %v1538, %v2412
  %v2607 = vmul.f32 %v1541, %v2412
  %v2608 = vmul.f32 %v1543, %v2412
  %v2609 = vmul.f32 %v1546, %v2412
  %v2610 = vmul.f32 %v1548, %v2412
  %v2611 = vmul.f32 %v1551, %v2412
  %v2612 = vmul.f32 %v1553, %v2412
  %v2613 = vmul.f32 %v1556, %v2412
  %v2614 = vmul.f32 %v1558, %v2412
  %v2615 = vmul.f32 %v1561, %v2412
  %v2616 = vmul.f32 %v1563, %v2412
  %v2617 = vmul.f32 %v1566, %v2412
  %v2618 = vmul.f32 %v1568, %v2412
  %v2619 = vmul.f32 %v1571, %v2412
  %v2620 = vmul.f32 %v1573, %v2412
  %v2621 = vmul.f32 %v1576, %v2412
  %v2622 = vmul.f32 %v1578, %v2412
  %v2623 = vmul.f32 %v1581, %v2412
  %v2624 = vmul.f32 %v1583, %v2412
  %v2625 = vmul.f32 %v1586, %v2412
  %v2626 = vmul.f32 %v1588, %v2412
  %v2627 = vmul.f32 %v1591, %v2412
  %v2628 = vmul.f32 %v1593, %v2412
  %v2629 = vmul.f32 %v1596, %v2412
  %v2630 = vmul.f32 %v1598, %v2412
  %v2631 = vmul.f32 %v1601, %v2412
  %v2632 = vmul.f32 %v1603, %v2412
  %v2633 = vmul.f32 %v1606, %v2412
  %v2634 = vmul.f32 %v1608, %v2412
  %v2635 = vmul.f32 %v1611, %v2412
  %v2636 = vmul.f32 %v1613, %v2412
  %v2637 = vmul.f32 %v1616, %v2412
  %v2638 = vmul.f32 %v1618, %v2412
  %v2639 = vmul.f32 %v1621, %v2412
  %v2640 = vmul.f32 %v1623, %v2412
  %v2641 = vmul.f32 %v1626, %v2412
  %v2642 = vmul.f32 %v1628, %v2412
  %v2643 = vmul.f32 %v1631, %v2412
  %v2644 = vmul.f32 %v1633, %v2412
  %v2645 = vmul.f32 %v1636, %v2412
  %v2646 = vmul.f32 %v1638, %v2412
  %v2647 = vmul.f32 %v1641, %v2412
  %v2648 = vmul.f32 %v1643, %v2412
  %v2649 = vmul.f32 %v1646, %v2412
  %v2650 = vmul.f32 %v1648, %v2412
  %v2651 = vmul.f32 %v1651, %v2412
  %v2652 = vmul.f32 %v1653, %v2412
  %v2653 = vmul.f32 %v1656, %v2412
  %v2655 = vperm.slane %v2411, 0
  %v2657 = vadd.f32 %v2413, %v2655
  %v2658 = vadd.f32 %v2414, %v2655
  %v2659 = vadd.f32 %v2415, %v2655
  %v2660 = vadd.f32 %v2416, %v2655
  %v2661 = vadd.f32 %v2417, %v2655
  %v2662 = vadd.f32 %v2418, %v2655
  %v2663 = vadd.f32 %v2419, %v2655
  %v2664 = vadd.f32 %v2420, %v2655
  %v2665 = vadd.f32 %v2421, %v2655
  %v2666 = vadd.f32 %v2422, %v2655
  %v2667 = vadd.f32 %v2423, %v2655
  %v2668 = vadd.f32 %v2424, %v2655
  %v2669 = vadd.f32 %v2425, %v2655
  %v2670 = vadd.f32 %v2426, %v2655
  %v2671 = vadd.f32 %v2427, %v2655
  %v2672 = vadd.f32 %v2428, %v2655
  %v2673 = vadd.f32 %v2429, %v2655
  %v2674 = vadd.f32 %v2430, %v2655
  %v2675 = vadd.f32 %v2431, %v2655
  %v2676 = vadd.f32 %v2432, %v2655
  %v2677 = vadd.f32 %v2433, %v2655
  %v2678 = vadd.f32 %v2434, %v2655
  %v2679 = vadd.f32 %v2435, %v2655
  %v2680 = vadd.f32 %v2436, %v2655
  %v2681 = vadd.f32 %v2437, %v2655
  %v2682 = vadd.f32 %v2438, %v2655
  %v2683 = vadd.f32 %v2439, %v2655
  %v2684 = vadd.f32 %v2440, %v2655
  %v2685 = vadd.f32 %v2441, %v2655
  %v2686 = vadd.f32 %v2442, %v2655
  %v2687 = vadd.f32 %v2443, %v2655
  %v2688 = vadd.f32 %v2444, %v2655
  %v2689 = vadd.f32 %v2445, %v2655
  %v2690 = vadd.f32 %v2446, %v2655
  %v2691 = vadd.f32 %v2447, %v2655
  %v2692 = vadd.f32 %v2448, %v2655
  %v2693 = vadd.f32 %v2449, %v2655
  %v2694 = vadd.f32 %v2450, %v2655
  %v2695 = vadd.f32 %v2451, %v2655
  %v2696 = vadd.f32 %v2452, %v2655
  %v2697 = vadd.f32 %v2453, %v2655
  %v2698 = vadd.f32 %v2454, %v2655
  %v2699 = vadd.f32 %v2455, %v2655
  %v2700 = vadd.f32 %v2456, %v2655
  %v2701 = vadd.f32 %v2457, %v2655
  %v2702 = vadd.f32 %v2458, %v2655
  %v2703 = vadd.f32 %v2459, %v2655
  %v2704 = vadd.f32 %v2460, %v2655
  %v2705 = vadd.f32 %v2461, %v2655
  %v2706 = vadd.f32 %v2462, %v2655
  %v2707 = vadd.f32 %v2463, %v2655
  %v2708 = vadd.f32 %v2464, %v2655
  %v2709 = vadd.f32 %v2465, %v2655
  %v2710 = vadd.f32 %v2466, %v2655
  %v2711 = vadd.f32 %v2467, %v2655
  %v2712 = vadd.f32 %v2468, %v2655
  %v2713 = vadd.f32 %v2469, %v2655
  %v2714 = vadd.f32 %v2470, %v2655
  %v2715 = vadd.f32 %v2471, %v2655
  %v2716 = vadd.f32 %v2472, %v2655
  %v2717 = vadd.f32 %v2473, %v2655
  %v2718 = vadd.f32 %v2474, %v2655
  %v2719 = vadd.f32 %v2475, %v2655
  %v2720 = vadd.f32 %v2476, %v2655
  %v2721 = vadd.f32 %v2477, %v2655
  %v2722 = vadd.f32 %v2478, %v2655
  %v2723 = vadd.f32 %v2479, %v2655
  %v2724 = vadd.f32 %v2480, %v2655
  %v2725 = vadd.f32 %v2481, %v2655
  %v2726 = vadd.f32 %v2482, %v2655
  %v2727 = vadd.f32 %v2483, %v2655
  %v2728 = vadd.f32 %v2484, %v2655
  %v2729 = vadd.f32 %v2485, %v2655
  %v2730 = vadd.f32 %v2486, %v2655
  %v2731 = vadd.f32 %v2487, %v2655
  %v2732 = vadd.f32 %v2488, %v2655
  %v2733 = vadd.f32 %v2489, %v2655
  %v2734 = vadd.f32 %v2490, %v2655
  %v2735 = vadd.f32 %v2491, %v2655
  %v2736 = vadd.f32 %v2492, %v2655
  %v2737 = vadd.f32 %v2493, %v2655
  %v2738 = vadd.f32 %v2494, %v2655
  %v2739 = vadd.f32 %v2495, %v2655
  %v2740 = vadd.f32 %v2496, %v2655
  %v2741 = vadd.f32 %v2497, %v2655
  %v2742 = vadd.f32 %v2498, %v2655
  %v2743 = vadd.f32 %v2499, %v2655
  %v2744 = vadd.f32 %v2500, %v2655
  %v2745 = vadd.f32 %v2501, %v2655
  %v2746 = vadd.f32 %v2502, %v2655
  %v2747 = vadd.f32 %v2503, %v2655
  %v2748 = vadd.f32 %v2504, %v2655
  %v2749 = vadd.f32 %v2505, %v2655
  %v2750 = vadd.f32 %v2506, %v2655
  %v2751 = vadd.f32 %v2507, %v2655
  %v2752 = vadd.f32 %v2508, %v2655
  %v2753 = vadd.f32 %v2509, %v2655
  %v2754 = vadd.f32 %v2510, %v2655
  %v2755 = vadd.f32 %v2511, %v2655
  %v2756 = vadd.f32 %v2512, %v2655
  %v2757 = vadd.f32 %v2513, %v2655
  %v2758 = vadd.f32 %v2514, %v2655
  %v2759 = vadd.f32 %v2515, %v2655
  %v2760 = vadd.f32 %v2516, %v2655
  %v2761 = vadd.f32 %v2517, %v2655
  %v2762 = vadd.f32 %v2518, %v2655
  %v2763 = vadd.f32 %v2519, %v2655
  %v2764 = vadd.f32 %v2520, %v2655
  %v2765 = vadd.f32 %v2521, %v2655
  %v2766 = vadd.f32 %v2522, %v2655
  %v2767 = vadd.f32 %v2523, %v2655
  %v2768 = vadd.f32 %v2524, %v2655
  %v2769 = vadd.f32 %v2525, %v2655
  %v2770 = vadd.f32 %v2526, %v2655
  %v2771 = vadd.f32 %v2527, %v2655
  %v2772 = vadd.f32 %v2528, %v2655
  %v2773 = vadd.f32 %v2529, %v2655
  %v2774 = vadd.f32 %v2530, %v2655
  %v2775 = vadd.f32 %v2531, %v2655
  %v2776 = vadd.f32 %v2532, %v2655
  %v2777 = vadd.f32 %v2533, %v2655
  %v2778 = vadd.f32 %v2534, %v2655
  %v2779 = vadd.f32 %v2535, %v2655
  %v2780 = vadd.f32 %v2536, %v2655
  %v2781 = vadd.f32 %v2537, %v2655
  %v2782 = vadd.f32 %v2538, %v2655
  %v2783 = vadd.f32 %v2539, %v2655
  %v2784 = vadd.f32 %v2540, %v2655
  %v2785 = vadd.f32 %v2541, %v2655
  %v2786 = vadd.f32 %v2542, %v2655
  %v2787 = vadd.f32 %v2543, %v2655
  %v2788 = vadd.f32 %v2544, %v2655
  %v2789 = vadd.f32 %v2545, %v2655
  %v2790 = vadd.f32 %v2546, %v2655
  %v2791 = vadd.f32 %v2547, %v2655
  %v2792 = vadd.f32 %v2548, %v2655
  %v2793 = vadd.f32 %v2549, %v2655
  %v2794 = vadd.f32 %v2550, %v2655
  %v2795 = vadd.f32 %v2551, %v2655
  %v2796 = vadd.f32 %v2552, %v2655
  %v2797 = vadd.f32 %v2553, %v2655
  %v2798 = vadd.f32 %v2554, %v2655
  %v2799 = vadd.f32 %v2555, %v2655
  %v2800 = vadd.f32 %v2556, %v2655
  %v2801 = vadd.f32 %v2557, %v2655
  %v2802 = vadd.f32 %v2558, %v2655
  %v2803 = vadd.f32 %v2559, %v2655
  %v2804 = vadd.f32 %v2560, %v2655
  %v2805 = vadd.f32 %v2561, %v2655
  %v2806 = vadd.f32 %v2562, %v2655
  %v2807 = vadd.f32 %v2563, %v2655
  %v2808 = vadd.f32 %v2564, %v2655
  %v2809 = vadd.f32 %v2565, %v2655
  %v2810 = vadd.f32 %v2566, %v2655
  %v2811 = vadd.f32 %v2567, %v2655
  %v2812 = vadd.f32 %v2568, %v2655
  %v2813 = vadd.f32 %v2569, %v2655
  %v2814 = vadd.f32 %v2570, %v2655
  %v2815 = vadd.f32 %v2571, %v2655
  %v2816 = vadd.f32 %v2572, %v2655
  %v2817 = vadd.f32 %v2573, %v2655
  %v2818 = vadd.f32 %v2574, %v2655
  %v2819 = vadd.f32 %v2575, %v2655
  %v2820 = vadd.f32 %v2576, %v2655
  %v2821 = vadd.f32 %v2577, %v2655
  %v2822 = vadd.f32 %v2578, %v2655
  %v2823 = vadd.f32 %v2579, %v2655
  %v2824 = vadd.f32 %v2580, %v2655
  %v2825 = vadd.f32 %v2581, %v2655
  %v2826 = vadd.f32 %v2582, %v2655
  %v2827 = vadd.f32 %v2583, %v2655
  %v2828 = vadd.f32 %v2584, %v2655
  %v2829 = vadd.f32 %v2585, %v2655
  %v2830 = vadd.f32 %v2586, %v2655
  %v2831 = vadd.f32 %v2587, %v2655
  %v2832 = vadd.f32 %v2588, %v2655
  %v2833 = vadd.f32 %v2589, %v2655
  %v2834 = vadd.f32 %v2590, %v2655
  %v2835 = vadd.f32 %v2591, %v2655
  %v2836 = vadd.f32 %v2592, %v2655
  %v2837 = vadd.f32 %v2593, %v2655
  %v2838 = vadd.f32 %v2594, %v2655
  %v2839 = vadd.f32 %v2595, %v2655
  %v2840 = vadd.f32 %v2596, %v2655
  %v2841 = vadd.f32 %v2597, %v2655
  %v2842 = vadd.f32 %v2598, %v2655
  %v2843 = vadd.f32 %v2599, %v2655
  %v2844 = vadd.f32 %v2600, %v2655
  %v2845 = vadd.f32 %v2601, %v2655
  %v2846 = vadd.f32 %v2602, %v2655
  %v2847 = vadd.f32 %v2603, %v2655
  %v2848 = vadd.f32 %v2604, %v2655
  %v2849 = vadd.f32 %v2605, %v2655
  %v2850 = vadd.f32 %v2606, %v2655
  %v2851 = vadd.f32 %v2607, %v2655
  %v2852 = vadd.f32 %v2608, %v2655
  %v2853 = vadd.f32 %v2609, %v2655
  %v2854 = vadd.f32 %v2610, %v2655
  %v2855 = vadd.f32 %v2611, %v2655
  %v2856 = vadd.f32 %v2612, %v2655
  %v2857 = vadd.f32 %v2613, %v2655
  %v2858 = vadd.f32 %v2614, %v2655
  %v2859 = vadd.f32 %v2615, %v2655
  %v2860 = vadd.f32 %v2616, %v2655
  %v2861 = vadd.f32 %v2617, %v2655
  %v2862 = vadd.f32 %v2618, %v2655
  %v2863 = vadd.f32 %v2619, %v2655
  %v2864 = vadd.f32 %v2620, %v2655
  %v2865 = vadd.f32 %v2621, %v2655
  %v2866 = vadd.f32 %v2622, %v2655
  %v2867 = vadd.f32 %v2623, %v2655
  %v2868 = vadd.f32 %v2624, %v2655
  %v2869 = vadd.f32 %v2625, %v2655
  %v2870 = vadd.f32 %v2626, %v2655
  %v2871 = vadd.f32 %v2627, %v2655
  %v2872 = vadd.f32 %v2628, %v2655
  %v2873 = vadd.f32 %v2629, %v2655
  %v2874 = vadd.f32 %v2630, %v2655
  %v2875 = vadd.f32 %v2631, %v2655
  %v2876 = vadd.f32 %v2632, %v2655
  %v2877 = vadd.f32 %v2633, %v2655
  %v2878 = vadd.f32 %v2634, %v2655
  %v2879 = vadd.f32 %v2635, %v2655
  %v2880 = vadd.f32 %v2636, %v2655
  %v2881 = vadd.f32 %v2637, %v2655
  %v2882 = vadd.f32 %v2638, %v2655
  %v2883 = vadd.f32 %v2639, %v2655
  %v2884 = vadd.f32 %v2640, %v2655
  %v2885 = vadd.f32 %v2641, %v2655
  %v2886 = vadd.f32 %v2642, %v2655
  %v2887 = vadd.f32 %v2643, %v2655
  %v2888 = vadd.f32 %v2644, %v2655
  %v2889 = vadd.f32 %v2645, %v2655
  %v2890 = vadd.f32 %v2646, %v2655
  %v2891 = vadd.f32 %v2647, %v2655
  %v2892 = vadd.f32 %v2648, %v2655
  %v2893 = vadd.f32 %v2649, %v2655
  %v2894 = vadd.f32 %v2650, %v2655
  %v2895 = vadd.f32 %v2651, %v2655
  %v2896 = vadd.f32 %v2652, %v2655
  %v2897 = vadd.f32 %v2653, %v2655
  %2898 = vst [vmem:[%s4] sm:$0xff] %v2657
  %2899 = vst [vmem:[%s4 + $0x8] sm:$0xff] %v2658
  %2900 = vst [vmem:[%s4 + $0x10] sm:$0xff] %v2659
  %2901 = vst [vmem:[%s4 + $0x18] sm:$0xff] %v2660
  %2902 = vst [vmem:[%s4 + $0x20] sm:$0xff] %v2661
  %2903 = vst [vmem:[%s4 + $0x28] sm:$0xff] %v2662
  %2904 = vst [vmem:[%s4 + $0x30] sm:$0xff] %v2663
  %2905 = vst [vmem:[%s4 + $0x38] sm:$0xff] %v2664
  %2906 = vst [vmem:[%s4 + $0x40] sm:$0xff] %v2665
  %2907 = vst [vmem:[%s4 + $0x48] sm:$0xff] %v2666
  %2908 = vst [vmem:[%s4 + $0x50] sm:$0xff] %v2667
  %2909 = vst [vmem:[%s4 + $0x58] sm:$0xff] %v2668
  %2910 = vst [vmem:[%s4 + $0x60] sm:$0xff] %v2669
  %2911 = vst [vmem:[%s4 + $0x68] sm:$0xff] %v2670
  %2912 = vst [vmem:[%s4 + $0x70] sm:$0xff] %v2671
  %2913 = vst [vmem:[%s4 + $0x78] sm:$0xff] %v2672
  %2914 = vst [vmem:[%s4 + $0x80] sm:$0xff] %v2673
  %2915 = vst [vmem:[%s4 + $0x88] sm:$0xff] %v2674
  %2916 = vst [vmem:[%s4 + $0x90] sm:$0xff] %v2675
  %2917 = vst [vmem:[%s4 + $0x98] sm:$0xff] %v2676
  %2918 = vst [vmem:[%s4 + $0xa0] sm:$0xff] %v2677
  %2919 = vst [vmem:[%s4 + $0xa8] sm:$0xff] %v2678
  %2920 = vst [vmem:[%s4 + $0xb0] sm:$0xff] %v2679
  %2921 = vst [vmem:[%s4 + $0xb8] sm:$0xff] %v2680
  %2922 = vst [vmem:[%s4 + $0xc0] sm:$0xff] %v2681
  %2923 = vst [vmem:[%s4 + $0xc8] sm:$0xff] %v2682
  %2924 = vst [vmem:[%s4 + $0xd0] sm:$0xff] %v2683
  %2925 = vst [vmem:[%s4 + $0xd8] sm:$0xff] %v2684
  %2926 = vst [vmem:[%s4 + $0xe0] sm:$0xff] %v2685
  %2927 = vst [vmem:[%s4 + $0xe8] sm:$0xff] %v2686
  %2928 = vst [vmem:[%s4 + $0xf0] sm:$0xff] %v2687
  %2929 = vst [vmem:[%s4 + $0xf8] sm:$0xff] %v2688
  %2930 = vst [vmem:[%s4 + $0x100] sm:$0xff] %v2689
  %2931 = vst [vmem:[%s4 + $0x108] sm:$0xff] %v2690
  %2932 = vst [vmem:[%s4 + $0x110] sm:$0xff] %v2691
  %2933 = vst [vmem:[%s4 + $0x118] sm:$0xff] %v2692
  %2934 = vst [vmem:[%s4 + $0x120] sm:$0xff] %v2693
  %2935 = vst [vmem:[%s4 + $0x128] sm:$0xff] %v2694
  %2936 = vst [vmem:[%s4 + $0x130] sm:$0xff] %v2695
  %2937 = vst [vmem:[%s4 + $0x138] sm:$0xff] %v2696
  %2938 = vst [vmem:[%s4 + $0x140] sm:$0xff] %v2697
  %2939 = vst [vmem:[%s4 + $0x148] sm:$0xff] %v2698
  %2940 = vst [vmem:[%s4 + $0x150] sm:$0xff] %v2699
  %2941 = vst [vmem:[%s4 + $0x158] sm:$0xff] %v2700
  %2942 = vst [vmem:[%s4 + $0x160] sm:$0xff] %v2701
  %2943 = vst [vmem:[%s4 + $0x168] sm:$0xff] %v2702
  %2944 = vst [vmem:[%s4 + $0x170] sm:$0xff] %v2703
  %2945 = vst [vmem:[%s4 + $0x178] sm:$0xff] %v2704
  %2946 = vst [vmem:[%s4 + $0x180] sm:$0xff] %v2705
  %2947 = vst [vmem:[%s4 + $0x188] sm:$0xff] %v2706
  %2948 = vst [vmem:[%s4 + $0x190] sm:$0xff] %v2707
  %2949 = vst [vmem:[%s4 + $0x198] sm:$0xff] %v2708
  %2950 = vst [vmem:[%s4 + $0x1a0] sm:$0xff] %v2709
  %2951 = vst [vmem:[%s4 + $0x1a8] sm:$0xff] %v2710
  %2952 = vst [vmem:[%s4 + $0x1b0] sm:$0xff] %v2711
  %2953 = vst [vmem:[%s4 + $0x1b8] sm:$0xff] %v2712
  %2954 = vst [vmem:[%s4 + $0x1c0] sm:$0xff] %v2713
  %2955 = vst [vmem:[%s4 + $0x1c8] sm:$0xff] %v2714
  %2956 = vst [vmem:[%s4 + $0x1d0] sm:$0xff] %v2715
  %2957 = vst [vmem:[%s4 + $0x1d8] sm:$0xff] %v2716
  %2958 = vst [vmem:[%s4 + $0x1e0] sm:$0xff] %v2717
  %2959 = vst [vmem:[%s4 + $0x1e8] sm:$0xff] %v2718
  %2960 = vst [vmem:[%s4 + $0x1f0] sm:$0xff] %v2719
  %2961 = vst [vmem:[%s4 + $0x1f8] sm:$0xff] %v2720
  %2962 = vst [vmem:[%s4 + $0x200] sm:$0xff] %v2721
  %2963 = vst [vmem:[%s4 + $0x208] sm:$0xff] %v2722
  %2964 = vst [vmem:[%s4 + $0x210] sm:$0xff] %v2723
  %2965 = vst [vmem:[%s4 + $0x218] sm:$0xff] %v2724
  %2966 = vst [vmem:[%s4 + $0x220] sm:$0xff] %v2725
  %2967 = vst [vmem:[%s4 + $0x228] sm:$0xff] %v2726
  %2968 = vst [vmem:[%s4 + $0x230] sm:$0xff] %v2727
  %2969 = vst [vmem:[%s4 + $0x238] sm:$0xff] %v2728
  %2970 = vst [vmem:[%s4 + $0x240] sm:$0xff] %v2729
  %2971 = vst [vmem:[%s4 + $0x248] sm:$0xff] %v2730
  %2972 = vst [vmem:[%s4 + $0x250] sm:$0xff] %v2731
  %2973 = vst [vmem:[%s4 + $0x258] sm:$0xff] %v2732
  %2974 = vst [vmem:[%s4 + $0x260] sm:$0xff] %v2733
  %2975 = vst [vmem:[%s4 + $0x268] sm:$0xff] %v2734
  %2976 = vst [vmem:[%s4 + $0x270] sm:$0xff] %v2735
  %2977 = vst [vmem:[%s4 + $0x278] sm:$0xff] %v2736
  %2978 = vst [vmem:[%s4 + $0x280] sm:$0xff] %v2737
  %2979 = vst [vmem:[%s4 + $0x288] sm:$0xff] %v2738
  %2980 = vst [vmem:[%s4 + $0x290] sm:$0xff] %v2739
  %2981 = vst [vmem:[%s4 + $0x298] sm:$0xff] %v2740
  %2982 = vst [vmem:[%s4 + $0x2a0] sm:$0xff] %v2741
  %2983 = vst [vmem:[%s4 + $0x2a8] sm:$0xff] %v2742
  %2984 = vst [vmem:[%s4 + $0x2b0] sm:$0xff] %v2743
  %2985 = vst [vmem:[%s4 + $0x2b8] sm:$0xff] %v2744
  %2986 = vst [vmem:[%s4 + $0x2c0] sm:$0xff] %v2745
  %2987 = vst [vmem:[%s4 + $0x2c8] sm:$0xff] %v2746
  %2988 = vst [vmem:[%s4 + $0x2d0] sm:$0xff] %v2747
  %2989 = vst [vmem:[%s4 + $0x2d8] sm:$0xff] %v2748
  %2990 = vst [vmem:[%s4 + $0x2e0] sm:$0xff] %v2749
  %2991 = vst [vmem:[%s4 + $0x2e8] sm:$0xff] %v2750
  %2992 = vst [vmem:[%s4 + $0x2f0] sm:$0xff] %v2751
  %2993 = vst [vmem:[%s4 + $0x2f8] sm:$0xff] %v2752
  %2994 = vst [vmem:[%s4 + $0x300] sm:$0xff] %v2753
  %2995 = vst [vmem:[%s4 + $0x308] sm:$0xff] %v2754
  %2996 = vst [vmem:[%s4 + $0x310] sm:$0xff] %v2755
  %2997 = vst [vmem:[%s4 + $0x318] sm:$0xff] %v2756
  %2998 = vst [vmem:[%s4 + $0x320] sm:$0xff] %v2757
  %2999 = vst [vmem:[%s4 + $0x328] sm:$0xff] %v2758
  %3000 = vst [vmem:[%s4 + $0x330] sm:$0xff] %v2759
  %3001 = vst [vmem:[%s4 + $0x338] sm:$0xff] %v2760
  %3002 = vst [vmem:[%s4 + $0x340] sm:$0xff] %v2761
  %3003 = vst [vmem:[%s4 + $0x348] sm:$0xff] %v2762
  %3004 = vst [vmem:[%s4 + $0x350] sm:$0xff] %v2763
  %3005 = vst [vmem:[%s4 + $0x358] sm:$0xff] %v2764
  %3006 = vst [vmem:[%s4 + $0x360] sm:$0xff] %v2765
  %3007 = vst [vmem:[%s4 + $0x368] sm:$0xff] %v2766
  %3008 = vst [vmem:[%s4 + $0x370] sm:$0xff] %v2767
  %3009 = vst [vmem:[%s4 + $0x378] sm:$0xff] %v2768
  %3010 = vst [vmem:[%s4 + $0x380] sm:$0xff] %v2769
  %3011 = vst [vmem:[%s4 + $0x388] sm:$0xff] %v2770
  %3012 = vst [vmem:[%s4 + $0x390] sm:$0xff] %v2771
  %3013 = vst [vmem:[%s4 + $0x398] sm:$0xff] %v2772
  %3014 = vst [vmem:[%s4 + $0x3a0] sm:$0xff] %v2773
  %3015 = vst [vmem:[%s4 + $0x3a8] sm:$0xff] %v2774
  %3016 = vst [vmem:[%s4 + $0x3b0] sm:$0xff] %v2775
  %3017 = vst [vmem:[%s4 + $0x3b8] sm:$0xff] %v2776
  %3018 = vst [vmem:[%s4 + $0x3c0] sm:$0xff] %v2777
  %3019 = vst [vmem:[%s4 + $0x3c8] sm:$0xff] %v2778
  %3020 = vst [vmem:[%s4 + $0x3d0] sm:$0xff] %v2779
  %3021 = vst [vmem:[%s4 + $0x3d8] sm:$0xff] %v2780
  %3022 = vst [vmem:[%s4 + $0x3e0] sm:$0xff] %v2781
  %3023 = vst [vmem:[%s4 + $0x3e8] sm:$0xff] %v2782
  %3024 = vst [vmem:[%s4 + $0x3f0] sm:$0xff] %v2783
  %3025 = vst [vmem:[%s4 + $0x3f8] sm:$0xff] %v2784
  %3026 = vst [vmem:[%s4 + $0x400] sm:$0xff] %v2785
  %3027 = vst [vmem:[%s4 + $0x408] sm:$0xff] %v2786
  %3028 = vst [vmem:[%s4 + $0x410] sm:$0xff] %v2787
  %3029 = vst [vmem:[%s4 + $0x418] sm:$0xff] %v2788
  %3030 = vst [vmem:[%s4 + $0x420] sm:$0xff] %v2789
  %3031 = vst [vmem:[%s4 + $0x428] sm:$0xff] %v2790
  %3032 = vst [vmem:[%s4 + $0x430] sm:$0xff] %v2791
  %3033 = vst [vmem:[%s4 + $0x438] sm:$0xff] %v2792
  %3034 = vst [vmem:[%s4 + $0x440] sm:$0xff] %v2793
  %3035 = vst [vmem:[%s4 + $0x448] sm:$0xff] %v2794
  %3036 = vst [vmem:[%s4 + $0x450] sm:$0xff] %v2795
  %3037 = vst [vmem:[%s4 + $0x458] sm:$0xff] %v2796
  %3038 = vst [vmem:[%s4 + $0x460] sm:$0xff] %v2797
  %3039 = vst [vmem:[%s4 + $0x468] sm:$0xff] %v2798
  %3040 = vst [vmem:[%s4 + $0x470] sm:$0xff] %v2799
  %3041 = vst [vmem:[%s4 + $0x478] sm:$0xff] %v2800
  %3042 = vst [vmem:[%s4 + $0x480] sm:$0xff] %v2801
  %3043 = vst [vmem:[%s4 + $0x488] sm:$0xff] %v2802
  %3044 = vst [vmem:[%s4 + $0x490] sm:$0xff] %v2803
  %3045 = vst [vmem:[%s4 + $0x498] sm:$0xff] %v2804
  %3046 = vst [vmem:[%s4 + $0x4a0] sm:$0xff] %v2805
  %3047 = vst [vmem:[%s4 + $0x4a8] sm:$0xff] %v2806
  %3048 = vst [vmem:[%s4 + $0x4b0] sm:$0xff] %v2807
  %3049 = vst [vmem:[%s4 + $0x4b8] sm:$0xff] %v2808
  %3050 = vst [vmem:[%s4 + $0x4c0] sm:$0xff] %v2809
  %3051 = vst [vmem:[%s4 + $0x4c8] sm:$0xff] %v2810
  %3052 = vst [vmem:[%s4 + $0x4d0] sm:$0xff] %v2811
  %3053 = vst [vmem:[%s4 + $0x4d8] sm:$0xff] %v2812
  %3054 = vst [vmem:[%s4 + $0x4e0] sm:$0xff] %v2813
  %3055 = vst [vmem:[%s4 + $0x4e8] sm:$0xff] %v2814
  %3056 = vst [vmem:[%s4 + $0x4f0] sm:$0xff] %v2815
  %3057 = vst [vmem:[%s4 + $0x4f8] sm:$0xff] %v2816
  %3058 = vst [vmem:[%s4 + $0x500] sm:$0xff] %v2817
  %3059 = vst [vmem:[%s4 + $0x508] sm:$0xff] %v2818
  %3060 = vst [vmem:[%s4 + $0x510] sm:$0xff] %v2819
  %3061 = vst [vmem:[%s4 + $0x518] sm:$0xff] %v2820
  %3062 = vst [vmem:[%s4 + $0x520] sm:$0xff] %v2821
  %3063 = vst [vmem:[%s4 + $0x528] sm:$0xff] %v2822
  %3064 = vst [vmem:[%s4 + $0x530] sm:$0xff] %v2823
  %3065 = vst [vmem:[%s4 + $0x538] sm:$0xff] %v2824
  %3066 = vst [vmem:[%s4 + $0x540] sm:$0xff] %v2825
  %3067 = vst [vmem:[%s4 + $0x548] sm:$0xff] %v2826
  %3068 = vst [vmem:[%s4 + $0x550] sm:$0xff] %v2827
  %3069 = vst [vmem:[%s4 + $0x558] sm:$0xff] %v2828
  %3070 = vst [vmem:[%s4 + $0x560] sm:$0xff] %v2829
  %3071 = vst [vmem:[%s4 + $0x568] sm:$0xff] %v2830
  %3072 = vst [vmem:[%s4 + $0x570] sm:$0xff] %v2831
  %3073 = vst [vmem:[%s4 + $0x578] sm:$0xff] %v2832
  %3074 = vst [vmem:[%s4 + $0x580] sm:$0xff] %v2833
  %3075 = vst [vmem:[%s4 + $0x588] sm:$0xff] %v2834
  %3076 = vst [vmem:[%s4 + $0x590] sm:$0xff] %v2835
  %3077 = vst [vmem:[%s4 + $0x598] sm:$0xff] %v2836
  %3078 = vst [vmem:[%s4 + $0x5a0] sm:$0xff] %v2837
  %3079 = vst [vmem:[%s4 + $0x5a8] sm:$0xff] %v2838
  %3080 = vst [vmem:[%s4 + $0x5b0] sm:$0xff] %v2839
  %3081 = vst [vmem:[%s4 + $0x5b8] sm:$0xff] %v2840
  %3082 = vst [vmem:[%s4 + $0x5c0] sm:$0xff] %v2841
  %3083 = vst [vmem:[%s4 + $0x5c8] sm:$0xff] %v2842
  %3084 = vst [vmem:[%s4 + $0x5d0] sm:$0xff] %v2843
  %3085 = vst [vmem:[%s4 + $0x5d8] sm:$0xff] %v2844
  %3086 = vst [vmem:[%s4 + $0x5e0] sm:$0xff] %v2845
  %3087 = vst [vmem:[%s4 + $0x5e8] sm:$0xff] %v2846
  %3088 = vst [vmem:[%s4 + $0x5f0] sm:$0xff] %v2847
  %3089 = vst [vmem:[%s4 + $0x5f8] sm:$0xff] %v2848
  %3090 = vst [vmem:[%s4 + $0x600] sm:$0xff] %v2849
  %3091 = vst [vmem:[%s4 + $0x608] sm:$0xff] %v2850
  %3092 = vst [vmem:[%s4 + $0x610] sm:$0xff] %v2851
  %3093 = vst [vmem:[%s4 + $0x618] sm:$0xff] %v2852
  %3094 = vst [vmem:[%s4 + $0x620] sm:$0xff] %v2853
  %3095 = vst [vmem:[%s4 + $0x628] sm:$0xff] %v2854
  %3096 = vst [vmem:[%s4 + $0x630] sm:$0xff] %v2855
  %3097 = vst [vmem:[%s4 + $0x638] sm:$0xff] %v2856
  %3098 = vst [vmem:[%s4 + $0x640] sm:$0xff] %v2857
  %3099 = vst [vmem:[%s4 + $0x648] sm:$0xff] %v2858
  %3100 = vst [vmem:[%s4 + $0x650] sm:$0xff] %v2859
  %3101 = vst [vmem:[%s4 + $0x658] sm:$0xff] %v2860
  %3102 = vst [vmem:[%s4 + $0x660] sm:$0xff] %v2861
  %3103 = vst [vmem:[%s4 + $0x668] sm:$0xff] %v2862
  %3104 = vst [vmem:[%s4 + $0x670] sm:$0xff] %v2863
  %3105 = vst [vmem:[%s4 + $0x678] sm:$0xff] %v2864
  %3106 = vst [vmem:[%s4 + $0x680] sm:$0xff] %v2865
  %3107 = vst [vmem:[%s4 + $0x688] sm:$0xff] %v2866
  %3108 = vst [vmem:[%s4 + $0x690] sm:$0xff] %v2867
  %3109 = vst [vmem:[%s4 + $0x698] sm:$0xff] %v2868
  %3110 = vst [vmem:[%s4 + $0x6a0] sm:$0xff] %v2869
  %3111 = vst [vmem:[%s4 + $0x6a8] sm:$0xff] %v2870
  %3112 = vst [vmem:[%s4 + $0x6b0] sm:$0xff] %v2871
  %3113 = vst [vmem:[%s4 + $0x6b8] sm:$0xff] %v2872
  %3114 = vst [vmem:[%s4 + $0x6c0] sm:$0xff] %v2873
  %3115 = vst [vmem:[%s4 + $0x6c8] sm:$0xff] %v2874
  %3116 = vst [vmem:[%s4 + $0x6d0] sm:$0xff] %v2875
  %3117 = vst [vmem:[%s4 + $0x6d8] sm:$0xff] %v2876
  %3118 = vst [vmem:[%s4 + $0x6e0] sm:$0xff] %v2877
  %3119 = vst [vmem:[%s4 + $0x6e8] sm:$0xff] %v2878
  %3120 = vst [vmem:[%s4 + $0x6f0] sm:$0xff] %v2879
  %3121 = vst [vmem:[%s4 + $0x6f8] sm:$0xff] %v2880
  %3122 = vst [vmem:[%s4 + $0x700] sm:$0xff] %v2881
  %3123 = vst [vmem:[%s4 + $0x708] sm:$0xff] %v2882
  %3124 = vst [vmem:[%s4 + $0x710] sm:$0xff] %v2883
  %3125 = vst [vmem:[%s4 + $0x718] sm:$0xff] %v2884
  %3126 = vst [vmem:[%s4 + $0x720] sm:$0xff] %v2885
  %3127 = vst [vmem:[%s4 + $0x728] sm:$0xff] %v2886
  %3128 = vst [vmem:[%s4 + $0x730] sm:$0xff] %v2887
  %3129 = vst [vmem:[%s4 + $0x738] sm:$0xff] %v2888
  %3130 = vst [vmem:[%s4 + $0x740] sm:$0xff] %v2889
  %3131 = vst [vmem:[%s4 + $0x748] sm:$0xff] %v2890
  %3132 = vst [vmem:[%s4 + $0x750] sm:$0xff] %v2891
  %3133 = vst [vmem:[%s4 + $0x758] sm:$0xff] %v2892
  %3134 = vst [vmem:[%s4 + $0x760] sm:$0xff] %v2893
  %3135 = vst [vmem:[%s4 + $0x768] sm:$0xff] %v2894
  %3136 = vst [vmem:[%s4 + $0x770] sm:$0xff] %v2895
  %3137 = vst [vmem:[%s4 + $0x778] sm:$0xff] %v2896
  %3138 = vst [vmem:[%s4 + $0x780] sm:$0xff] %v2897
  // Predicated region
  $region18: #{decbr2d_forward.1} parent=0 // pred_check
    _
  $region19: #{decbr2d_forward.1} parent=0 // pred_check_branch
    %3140 = sbr.rel (0) target = $region21
  $region20: #{decbr2d_forward.1} parent=0 // pred_region
    _
  $region21: #{decbr2d_forward.1} parent=0 // pred_fallthru
    _
  // Predicated region
  $region22: #{decbr2d_forward.1} parent=0 // pred_check
    _
  $region23: #{decbr2d_forward.1} parent=0 // pred_check_branch
    %3142 = sbr.rel (0) target = $region25
  $region24: #{decbr2d_forward.1} parent=0 // pred_region
    _
  $region25: #{decbr2d_forward.1} parent=0 // pred_fallthru
    _

</llo_original>
